<compile_context>
chip_gen: v7x
topology: tpu7x:2x2x1
jax: 0.10.0
libtpu: 0.0.40
codegen_flags: <defaults>
</compile_context>

<pallas_src>
import functools

import jax
import jax.numpy as jnp
from jax.experimental import pallas as pl
from jax.experimental.pallas import tpu as pltpu  # noqa: F401  (TPU backend; no TPU-specific params needed at these sizes)


def _gru_kernel(pa_ref, pr_ref, px_ref, wa_ref, wr_ref, wx_ref, whh_ref,
                bih_ref, bhh_ref, out_ref, *, T, A, O, H, B):
    """Whole GRU (all T steps) in one kernel invocation.

    pa_ref : (B, T*A)  flattened previous actions
    pr_ref : (B, T)    flattened previous rewards
    px_ref : (B, T*O)  flattened previous observations
    wa/wr/wx : row-wise split of W_ih^T -> (A,3H), (1,3H), (O,3H)
    whh_ref  : W_hh^T (H, 3H)
    bih/bhh  : (1, 3H) biases, gate order [r, z, n]
    out_ref  : (B, H) final hidden state
    """
    wa = wa_ref[...]
    wr = wr_ref[...]
    wx = wx_ref[...]
    whh = whh_ref[...]
    bih = bih_ref[...]                                   # (1, 3H)
    bhh = jnp.broadcast_to(bhh_ref[...], (B, 3 * H))     # hoisted broadcast, once

    pa = pa_ref[...]                                     # (B, T*A)
    pr = pr_ref[...]                                     # (B, T)
    px = px_ref[...]                                     # (B, T*O)

    # ---- Input projection for all timesteps (no dependence on h -> parallel work) ----
    gi = []
    for t in range(T):
        a_t = pa[:, t * A:(t + 1) * A]                   # (B, A)  static lane slice
        r_t = pr[:, t:t + 1]                             # (B, 1)
        s_t = px[:, t * O:(t + 1) * O]                   # (B, O)
        gi_t = (jnp.dot(a_t, wa, preferred_element_type=jnp.float32)
                + r_t * wr                               # (B,1)*(1,3H) outer product on VPU
                + jnp.dot(s_t, wx, preferred_element_type=jnp.float32)
                + bih)                                   # (B, 3H)
        gi.append(gi_t)

    # ---- Serial GRU recurrence; h stays in vregs (no VMEM scratch) ----
    h = jnp.zeros((B, H), jnp.float32)
    for t in range(T):
        gh = jnp.dot(h, whh, preferred_element_type=jnp.float32) + bhh   # (B, 3H)
        gi_t = gi[t]
        r = jax.nn.sigmoid(gi_t[:, 0:H] + gh[:, 0:H])
        z = jax.nn.sigmoid(gi_t[:, H:2 * H] + gh[:, H:2 * H])
        n = jnp.tanh(gi_t[:, 2 * H:3 * H] + r * gh[:, 2 * H:3 * H])
        h = (1.0 - z) * n + z * h

    out_ref[...] = h.astype(out_ref.dtype)


@jax.jit
def gru_context_pallas(pa, pr, px, w_a, w_r, w_x, w_hh_t, b_ih, b_hh):
    """pa: (B, T*A), pr: (B, T), px: (B, T*O). Returns final hidden state (B, H)."""
    B = pa.shape[0]
    T = pr.shape[1]
    A = w_a.shape[0]
    O = w_x.shape[0]
    H = w_hh_t.shape[0]

    kernel = functools.partial(_gru_kernel, T=T, A=A, O=O, H=H, B=B)
    # No grid: every operand is tiny (<50 KB total) and lives fully in VMEM;
    # a single invocation avoids all per-grid-step pipeline overhead.
    # TODO(synk): if production batch sizes are large, add a "parallel" batch grid
    # axis (sublane-multiple tiles) so v7x's two TensorCores split the batch.
    return pl.pallas_call(
        kernel,
        out_shape=jax.ShapeDtypeStruct((B, H), jnp.float32),
    )(pa, pr, px, w_a, w_r, w_x, w_hh_t, b_ih, b_hh)


class ContextPallas:
    """JAX/Pallas equivalent of models.networks.Context with only_concat_context=3."""

    def __init__(self, hidden_sizes=(32,), output_dim=32, input_dim=None,
                 only_concat_context=3, history_length=8,
                 action_dim=None, obsr_dim=None, key=None):
        assert only_concat_context == 3
        self.hidden_size = hidden_sizes[0]
        self.input_dim = input_dim
        self.action_dim = action_dim
        self.obsr_dim = obsr_dim
        self.hist_length = history_length
        self.output_dim_final = output_dim
        self.output_dim_last_layer = output_dim // 2

        H, D, A, O = self.hidden_size, self.input_dim, self.action_dim, self.obsr_dim
        assert D == A + 1 + O, "input_dim must equal action_dim + 1 + obsr_dim"

        # Deterministic GRU parameter init mirroring torch.nn.GRU's
        # uniform(-1/sqrt(H), 1/sqrt(H)). Gate order [r, z, n], stored transposed
        # (right-multiply form) for the kernel.
        bound = 1.0 / float(H) ** 0.5
        k = key if key is not None else jax.random.PRNGKey(42)
        k1, k2, k3, k4 = jax.random.split(k, 4)
        self.w_ih_t = jax.random.uniform(k1, (D, 3 * H), jnp.float32, -bound, bound)
        # Row-wise split so the action/reward/obs concat is fused into the kernel.
        self.w_a = self.w_ih_t[:A]                 # (A, 3H)
        self.w_r = self.w_ih_t[A:A + 1]            # (1, 3H)
        self.w_x = self.w_ih_t[A + 1:]             # (O, 3H)
        self.w_hh_t = jax.random.uniform(k2, (H, 3 * H), jnp.float32, -bound, bound)
        self.b_ih = jax.random.uniform(k3, (1, 3 * H), jnp.float32, -bound, bound)
        self.b_hh = jax.random.uniform(k4, (1, 3 * H), jnp.float32, -bound, bound)

    def forward(self, data):
        previous_action, previous_reward, pre_x = data[0], data[1], data[2]
        bsize = previous_action.shape[0]
        pa = previous_action.reshape(bsize, -1).astype(jnp.float32)   # (B, T*A)
        pr = previous_reward.reshape(bsize, -1).astype(jnp.float32)   # (B, T)
        px = pre_x.reshape(bsize, -1).astype(jnp.float32)             # (B, T*O)
        return gru_context_pallas(pa, pr, px, self.w_a, self.w_r, self.w_x,
                                  self.w_hh_t, self.b_ih, self.b_hh)  # (B, H)

    # Pure-JAX reference of the same GRU (uses the un-split W_ih and explicit
    # concat/transpose), for correctness checking.
    def forward_ref(self, data):
        previous_action, previous_reward, pre_x = data[0], data[1], data[2]
        bsize = previous_action.shape[0]
        pacts = previous_action.reshape(bsize, -1, self.action_dim)
        prews = previous_reward.reshape(bsize, -1, 1)
        pxs = pre_x.reshape(bsize, -1, self.obsr_dim)
        x = jnp.concatenate([pacts, prews, pxs], axis=-1).astype(jnp.float32)
        H = self.hidden_size

        def step(h, x_t):
            gi = x_t @ self.w_ih_t + self.b_ih
            gh = h @ self.w_hh_t + self.b_hh
            r = jax.nn.sigmoid(gi[:, :H] + gh[:, :H])
            z = jax.nn.sigmoid(gi[:, H:2 * H] + gh[:, H:2 * H])
            n = jnp.tanh(gi[:, 2 * H:] + r * gh[:, 2 * H:])
            h_new = (1.0 - z) * n + z * h
            return h_new, None

        h0 = jnp.zeros((bsize, H), jnp.float32)
        h_last, _ = jax.lax.scan(step, h0, jnp.transpose(x, (1, 0, 2)))
        return h_last


if __name__ == "__main__":
    # Small, module-consistent shapes.
    B = 2               # batch
    T = 8               # history_length
    A = 4               # action_dim
    O = 11              # obsr_dim
    D = A + 1 + O       # GRU input_dim = 16
    H = 32              # hidden_sizes[0]

    key = jax.random.PRNGKey(0)
    ka, kr, kx, kp = jax.random.split(key, 4)
    previous_action = jax.random.normal(ka, (B, T * A), jnp.float32)
    previous_reward = jax.random.normal(kr, (B, T * 1), jnp.float32)
    pre_x = jax.random.normal(kx, (B, T * O), jnp.float32)

    ctx = ContextPallas(hidden_sizes=(H,), output_dim=H, input_dim=D,
                        only_concat_context=3, history_length=T,
                        action_dim=A, obsr_dim=O, key=kp)

    data = (previous_action, previous_reward, pre_x)
    out = jax.block_until_ready(ctx.forward(data))

    ref = jax.block_until_ready(ctx.forward_ref(data))
    assert out.shape == (B, H)
    assert jnp.allclose(out, ref, atol=1e-4, rtol=1e-4), "Pallas GRU mismatch vs reference"

    print("KERNEL_OK")
</pallas_src>

<mosaic_0001>
module attributes {stable_mosaic.version = 11 : i64} {
  func.func @_gru_kernel(%arg0: memref<2x32xf32, #tpu.memory_space<vmem>>, %arg1: memref<2x8xf32, #tpu.memory_space<vmem>>, %arg2: memref<2x88xf32, #tpu.memory_space<vmem>>, %arg3: memref<4x96xf32, #tpu.memory_space<vmem>>, %arg4: memref<1x96xf32, #tpu.memory_space<vmem>>, %arg5: memref<11x96xf32, #tpu.memory_space<vmem>>, %arg6: memref<32x96xf32, #tpu.memory_space<vmem>>, %arg7: memref<1x96xf32, #tpu.memory_space<vmem>>, %arg8: memref<1x96xf32, #tpu.memory_space<vmem>>, %arg9: memref<2x32xf32, #tpu.memory_space<vmem>>) attributes {dimension_semantics = [], scalar_prefetch = 0 : i64, scratch_operands = 0 : i64, tpu.core_type = #tpu.core_type<tc>} {
    %c0 = arith.constant 0 : index
    %c0_0 = arith.constant 0 : index
    %0 = vector.load %arg3[%c0, %c0_0] : memref<4x96xf32, #tpu.memory_space<vmem>>, vector<4x96xf32>
    %c0_1 = arith.constant 0 : index
    %c0_2 = arith.constant 0 : index
    %1 = vector.load %arg4[%c0_1, %c0_2] : memref<1x96xf32, #tpu.memory_space<vmem>>, vector<1x96xf32>
    %c0_3 = arith.constant 0 : index
    %c0_4 = arith.constant 0 : index
    %2 = vector.load %arg5[%c0_3, %c0_4] : memref<11x96xf32, #tpu.memory_space<vmem>>, vector<11x96xf32>
    %c0_5 = arith.constant 0 : index
    %c0_6 = arith.constant 0 : index
    %3 = vector.load %arg6[%c0_5, %c0_6] : memref<32x96xf32, #tpu.memory_space<vmem>>, vector<32x96xf32>
    %c0_7 = arith.constant 0 : index
    %c0_8 = arith.constant 0 : index
    %4 = vector.load %arg7[%c0_7, %c0_8] : memref<1x96xf32, #tpu.memory_space<vmem>>, vector<1x96xf32>
    %c0_9 = arith.constant 0 : index
    %c0_10 = arith.constant 0 : index
    %5 = vector.load %arg8[%c0_9, %c0_10] : memref<1x96xf32, #tpu.memory_space<vmem>>, vector<1x96xf32>
    %6 = vector.shape_cast %5 : vector<1x96xf32> to vector<1x96xf32>
    %7 = vector.broadcast %6 : vector<1x96xf32> to vector<2x96xf32>
    %c0_11 = arith.constant 0 : index
    %c0_12 = arith.constant 0 : index
    %8 = vector.load %arg0[%c0_11, %c0_12] : memref<2x32xf32, #tpu.memory_space<vmem>>, vector<2x32xf32>
    %c0_13 = arith.constant 0 : index
    %c0_14 = arith.constant 0 : index
    %9 = vector.load %arg1[%c0_13, %c0_14] : memref<2x8xf32, #tpu.memory_space<vmem>>, vector<2x8xf32>
    %c0_15 = arith.constant 0 : index
    %c0_16 = arith.constant 0 : index
    %10 = vector.load %arg2[%c0_15, %c0_16] : memref<2x88xf32, #tpu.memory_space<vmem>>, vector<2x88xf32>
    %11 = vector.extract_strided_slice %8 {offsets = [0, 0], sizes = [2, 4], strides = [1, 1]} : vector<2x32xf32> to vector<2x4xf32>
    %12 = vector.extract_strided_slice %9 {offsets = [0, 0], sizes = [2, 1], strides = [1, 1]} : vector<2x8xf32> to vector<2x1xf32>
    %13 = vector.extract_strided_slice %10 {offsets = [0, 0], sizes = [2, 11], strides = [1, 1]} : vector<2x88xf32> to vector<2x11xf32>
    %cst = arith.constant dense<0.000000e+00> : vector<2x96xf32>
    %14 = tpu.matmul %11, %0, %cst {dimension_numbers = #tpu.dot_dimension_numbers<[1], [0], [0], [1], [0, 0, 1, 1], [], []>} : vector<2x4xf32>, vector<4x96xf32>, vector<2x96xf32> -> vector<2x96xf32>
    %15 = vector.broadcast %12 : vector<2x1xf32> to vector<2x96xf32>
    %16 = vector.broadcast %1 : vector<1x96xf32> to vector<2x96xf32>
    %17 = arith.mulf %15, %16 : vector<2x96xf32>
    %18 = arith.addf %14, %17 : vector<2x96xf32>
    %cst_17 = arith.constant dense<0.000000e+00> : vector<2x96xf32>
    %19 = tpu.matmul %13, %2, %cst_17 {dimension_numbers = #tpu.dot_dimension_numbers<[1], [0], [0], [1], [0, 0, 1, 1], [], []>} : vector<2x11xf32>, vector<11x96xf32>, vector<2x96xf32> -> vector<2x96xf32>
    %20 = arith.addf %18, %19 : vector<2x96xf32>
    %21 = vector.broadcast %4 : vector<1x96xf32> to vector<2x96xf32>
    %22 = arith.addf %20, %21 : vector<2x96xf32>
    %23 = vector.extract_strided_slice %8 {offsets = [0, 4], sizes = [2, 4], strides = [1, 1]} : vector<2x32xf32> to vector<2x4xf32>
    %24 = vector.extract_strided_slice %9 {offsets = [0, 1], sizes = [2, 1], strides = [1, 1]} : vector<2x8xf32> to vector<2x1xf32>
    %25 = vector.extract_strided_slice %10 {offsets = [0, 11], sizes = [2, 11], strides = [1, 1]} : vector<2x88xf32> to vector<2x11xf32>
    %cst_18 = arith.constant dense<0.000000e+00> : vector<2x96xf32>
    %26 = tpu.matmul %23, %0, %cst_18 {dimension_numbers = #tpu.dot_dimension_numbers<[1], [0], [0], [1], [0, 0, 1, 1], [], []>} : vector<2x4xf32>, vector<4x96xf32>, vector<2x96xf32> -> vector<2x96xf32>
    %27 = vector.broadcast %24 : vector<2x1xf32> to vector<2x96xf32>
    %28 = vector.broadcast %1 : vector<1x96xf32> to vector<2x96xf32>
    %29 = arith.mulf %27, %28 : vector<2x96xf32>
    %30 = arith.addf %26, %29 : vector<2x96xf32>
    %cst_19 = arith.constant dense<0.000000e+00> : vector<2x96xf32>
    %31 = tpu.matmul %25, %2, %cst_19 {dimension_numbers = #tpu.dot_dimension_numbers<[1], [0], [0], [1], [0, 0, 1, 1], [], []>} : vector<2x11xf32>, vector<11x96xf32>, vector<2x96xf32> -> vector<2x96xf32>
    %32 = arith.addf %30, %31 : vector<2x96xf32>
    %33 = vector.broadcast %4 : vector<1x96xf32> to vector<2x96xf32>
    %34 = arith.addf %32, %33 : vector<2x96xf32>
    %35 = vector.extract_strided_slice %8 {offsets = [0, 8], sizes = [2, 4], strides = [1, 1]} : vector<2x32xf32> to vector<2x4xf32>
    %36 = vector.extract_strided_slice %9 {offsets = [0, 2], sizes = [2, 1], strides = [1, 1]} : vector<2x8xf32> to vector<2x1xf32>
    %37 = vector.extract_strided_slice %10 {offsets = [0, 22], sizes = [2, 11], strides = [1, 1]} : vector<2x88xf32> to vector<2x11xf32>
    %cst_20 = arith.constant dense<0.000000e+00> : vector<2x96xf32>
    %38 = tpu.matmul %35, %0, %cst_20 {dimension_numbers = #tpu.dot_dimension_numbers<[1], [0], [0], [1], [0, 0, 1, 1], [], []>} : vector<2x4xf32>, vector<4x96xf32>, vector<2x96xf32> -> vector<2x96xf32>
    %39 = vector.broadcast %36 : vector<2x1xf32> to vector<2x96xf32>
    %40 = vector.broadcast %1 : vector<1x96xf32> to vector<2x96xf32>
    %41 = arith.mulf %39, %40 : vector<2x96xf32>
    %42 = arith.addf %38, %41 : vector<2x96xf32>
    %cst_21 = arith.constant dense<0.000000e+00> : vector<2x96xf32>
    %43 = tpu.matmul %37, %2, %cst_21 {dimension_numbers = #tpu.dot_dimension_numbers<[1], [0], [0], [1], [0, 0, 1, 1], [], []>} : vector<2x11xf32>, vector<11x96xf32>, vector<2x96xf32> -> vector<2x96xf32>
    %44 = arith.addf %42, %43 : vector<2x96xf32>
    %45 = vector.broadcast %4 : vector<1x96xf32> to vector<2x96xf32>
    %46 = arith.addf %44, %45 : vector<2x96xf32>
    %47 = vector.extract_strided_slice %8 {offsets = [0, 12], sizes = [2, 4], strides = [1, 1]} : vector<2x32xf32> to vector<2x4xf32>
    %48 = vector.extract_strided_slice %9 {offsets = [0, 3], sizes = [2, 1], strides = [1, 1]} : vector<2x8xf32> to vector<2x1xf32>
    %49 = vector.extract_strided_slice %10 {offsets = [0, 33], sizes = [2, 11], strides = [1, 1]} : vector<2x88xf32> to vector<2x11xf32>
    %cst_22 = arith.constant dense<0.000000e+00> : vector<2x96xf32>
    %50 = tpu.matmul %47, %0, %cst_22 {dimension_numbers = #tpu.dot_dimension_numbers<[1], [0], [0], [1], [0, 0, 1, 1], [], []>} : vector<2x4xf32>, vector<4x96xf32>, vector<2x96xf32> -> vector<2x96xf32>
    %51 = vector.broadcast %48 : vector<2x1xf32> to vector<2x96xf32>
    %52 = vector.broadcast %1 : vector<1x96xf32> to vector<2x96xf32>
    %53 = arith.mulf %51, %52 : vector<2x96xf32>
    %54 = arith.addf %50, %53 : vector<2x96xf32>
    %cst_23 = arith.constant dense<0.000000e+00> : vector<2x96xf32>
    %55 = tpu.matmul %49, %2, %cst_23 {dimension_numbers = #tpu.dot_dimension_numbers<[1], [0], [0], [1], [0, 0, 1, 1], [], []>} : vector<2x11xf32>, vector<11x96xf32>, vector<2x96xf32> -> vector<2x96xf32>
    %56 = arith.addf %54, %55 : vector<2x96xf32>
    %57 = vector.broadcast %4 : vector<1x96xf32> to vector<2x96xf32>
    %58 = arith.addf %56, %57 : vector<2x96xf32>
    %59 = vector.extract_strided_slice %8 {offsets = [0, 16], sizes = [2, 4], strides = [1, 1]} : vector<2x32xf32> to vector<2x4xf32>
    %60 = vector.extract_strided_slice %9 {offsets = [0, 4], sizes = [2, 1], strides = [1, 1]} : vector<2x8xf32> to vector<2x1xf32>
    %61 = vector.extract_strided_slice %10 {offsets = [0, 44], sizes = [2, 11], strides = [1, 1]} : vector<2x88xf32> to vector<2x11xf32>
    %cst_24 = arith.constant dense<0.000000e+00> : vector<2x96xf32>
    %62 = tpu.matmul %59, %0, %cst_24 {dimension_numbers = #tpu.dot_dimension_numbers<[1], [0], [0], [1], [0, 0, 1, 1], [], []>} : vector<2x4xf32>, vector<4x96xf32>, vector<2x96xf32> -> vector<2x96xf32>
    %63 = vector.broadcast %60 : vector<2x1xf32> to vector<2x96xf32>
    %64 = vector.broadcast %1 : vector<1x96xf32> to vector<2x96xf32>
    %65 = arith.mulf %63, %64 : vector<2x96xf32>
    %66 = arith.addf %62, %65 : vector<2x96xf32>
    %cst_25 = arith.constant dense<0.000000e+00> : vector<2x96xf32>
    %67 = tpu.matmul %61, %2, %cst_25 {dimension_numbers = #tpu.dot_dimension_numbers<[1], [0], [0], [1], [0, 0, 1, 1], [], []>} : vector<2x11xf32>, vector<11x96xf32>, vector<2x96xf32> -> vector<2x96xf32>
    %68 = arith.addf %66, %67 : vector<2x96xf32>
    %69 = vector.broadcast %4 : vector<1x96xf32> to vector<2x96xf32>
    %70 = arith.addf %68, %69 : vector<2x96xf32>
    %71 = vector.extract_strided_slice %8 {offsets = [0, 20], sizes = [2, 4], strides = [1, 1]} : vector<2x32xf32> to vector<2x4xf32>
    %72 = vector.extract_strided_slice %9 {offsets = [0, 5], sizes = [2, 1], strides = [1, 1]} : vector<2x8xf32> to vector<2x1xf32>
    %73 = vector.extract_strided_slice %10 {offsets = [0, 55], sizes = [2, 11], strides = [1, 1]} : vector<2x88xf32> to vector<2x11xf32>
    %cst_26 = arith.constant dense<0.000000e+00> : vector<2x96xf32>
    %74 = tpu.matmul %71, %0, %cst_26 {dimension_numbers = #tpu.dot_dimension_numbers<[1], [0], [0], [1], [0, 0, 1, 1], [], []>} : vector<2x4xf32>, vector<4x96xf32>, vector<2x96xf32> -> vector<2x96xf32>
    %75 = vector.broadcast %72 : vector<2x1xf32> to vector<2x96xf32>
    %76 = vector.broadcast %1 : vector<1x96xf32> to vector<2x96xf32>
    %77 = arith.mulf %75, %76 : vector<2x96xf32>
    %78 = arith.addf %74, %77 : vector<2x96xf32>
    %cst_27 = arith.constant dense<0.000000e+00> : vector<2x96xf32>
    %79 = tpu.matmul %73, %2, %cst_27 {dimension_numbers = #tpu.dot_dimension_numbers<[1], [0], [0], [1], [0, 0, 1, 1], [], []>} : vector<2x11xf32>, vector<11x96xf32>, vector<2x96xf32> -> vector<2x96xf32>
    %80 = arith.addf %78, %79 : vector<2x96xf32>
    %81 = vector.broadcast %4 : vector<1x96xf32> to vector<2x96xf32>
    %82 = arith.addf %80, %81 : vector<2x96xf32>
    %83 = vector.extract_strided_slice %8 {offsets = [0, 24], sizes = [2, 4], strides = [1, 1]} : vector<2x32xf32> to vector<2x4xf32>
    %84 = vector.extract_strided_slice %9 {offsets = [0, 6], sizes = [2, 1], strides = [1, 1]} : vector<2x8xf32> to vector<2x1xf32>
    %85 = vector.extract_strided_slice %10 {offsets = [0, 66], sizes = [2, 11], strides = [1, 1]} : vector<2x88xf32> to vector<2x11xf32>
    %cst_28 = arith.constant dense<0.000000e+00> : vector<2x96xf32>
    %86 = tpu.matmul %83, %0, %cst_28 {dimension_numbers = #tpu.dot_dimension_numbers<[1], [0], [0], [1], [0, 0, 1, 1], [], []>} : vector<2x4xf32>, vector<4x96xf32>, vector<2x96xf32> -> vector<2x96xf32>
    %87 = vector.broadcast %84 : vector<2x1xf32> to vector<2x96xf32>
    %88 = vector.broadcast %1 : vector<1x96xf32> to vector<2x96xf32>
    %89 = arith.mulf %87, %88 : vector<2x96xf32>
    %90 = arith.addf %86, %89 : vector<2x96xf32>
    %cst_29 = arith.constant dense<0.000000e+00> : vector<2x96xf32>
    %91 = tpu.matmul %85, %2, %cst_29 {dimension_numbers = #tpu.dot_dimension_numbers<[1], [0], [0], [1], [0, 0, 1, 1], [], []>} : vector<2x11xf32>, vector<11x96xf32>, vector<2x96xf32> -> vector<2x96xf32>
    %92 = arith.addf %90, %91 : vector<2x96xf32>
    %93 = vector.broadcast %4 : vector<1x96xf32> to vector<2x96xf32>
    %94 = arith.addf %92, %93 : vector<2x96xf32>
    %95 = vector.extract_strided_slice %8 {offsets = [0, 28], sizes = [2, 4], strides = [1, 1]} : vector<2x32xf32> to vector<2x4xf32>
    %96 = vector.extract_strided_slice %9 {offsets = [0, 7], sizes = [2, 1], strides = [1, 1]} : vector<2x8xf32> to vector<2x1xf32>
    %97 = vector.extract_strided_slice %10 {offsets = [0, 77], sizes = [2, 11], strides = [1, 1]} : vector<2x88xf32> to vector<2x11xf32>
    %cst_30 = arith.constant dense<0.000000e+00> : vector<2x96xf32>
    %98 = tpu.matmul %95, %0, %cst_30 {dimension_numbers = #tpu.dot_dimension_numbers<[1], [0], [0], [1], [0, 0, 1, 1], [], []>} : vector<2x4xf32>, vector<4x96xf32>, vector<2x96xf32> -> vector<2x96xf32>
    %99 = vector.broadcast %96 : vector<2x1xf32> to vector<2x96xf32>
    %100 = vector.broadcast %1 : vector<1x96xf32> to vector<2x96xf32>
    %101 = arith.mulf %99, %100 : vector<2x96xf32>
    %102 = arith.addf %98, %101 : vector<2x96xf32>
    %cst_31 = arith.constant dense<0.000000e+00> : vector<2x96xf32>
    %103 = tpu.matmul %97, %2, %cst_31 {dimension_numbers = #tpu.dot_dimension_numbers<[1], [0], [0], [1], [0, 0, 1, 1], [], []>} : vector<2x11xf32>, vector<11x96xf32>, vector<2x96xf32> -> vector<2x96xf32>
    %104 = arith.addf %102, %103 : vector<2x96xf32>
    %105 = vector.broadcast %4 : vector<1x96xf32> to vector<2x96xf32>
    %106 = arith.addf %104, %105 : vector<2x96xf32>
    %cst_32 = arith.constant 0.000000e+00 : f32
    %107 = vector.broadcast %cst_32 : f32 to vector<2x32xf32>
    %cst_33 = arith.constant dense<0.000000e+00> : vector<2x96xf32>
    %108 = tpu.matmul %107, %3, %cst_33 {dimension_numbers = #tpu.dot_dimension_numbers<[1], [0], [0], [1], [0, 0, 1, 1], [], []>} : vector<2x32xf32>, vector<32x96xf32>, vector<2x96xf32> -> vector<2x96xf32>
    %109 = arith.addf %108, %7 : vector<2x96xf32>
    %110 = vector.extract_strided_slice %22 {offsets = [0, 0], sizes = [2, 32], strides = [1, 1]} : vector<2x96xf32> to vector<2x32xf32>
    %111 = vector.extract_strided_slice %109 {offsets = [0, 0], sizes = [2, 32], strides = [1, 1]} : vector<2x96xf32> to vector<2x32xf32>
    %112 = arith.addf %110, %111 : vector<2x32xf32>
    %113 = arith.negf %112 : vector<2x32xf32>
    %114 = math.exp %113 : vector<2x32xf32>
    %cst_34 = arith.constant 1.000000e+00 : f32
    %115 = vector.broadcast %cst_34 : f32 to vector<2x32xf32>
    %116 = arith.addf %115, %114 : vector<2x32xf32>
    %117 = arith.divf %115, %116 : vector<2x32xf32>
    %118 = vector.extract_strided_slice %22 {offsets = [0, 32], sizes = [2, 32], strides = [1, 1]} : vector<2x96xf32> to vector<2x32xf32>
    %119 = vector.extract_strided_slice %109 {offsets = [0, 32], sizes = [2, 32], strides = [1, 1]} : vector<2x96xf32> to vector<2x32xf32>
    %120 = arith.addf %118, %119 : vector<2x32xf32>
    %121 = arith.negf %120 : vector<2x32xf32>
    %122 = math.exp %121 : vector<2x32xf32>
    %cst_35 = arith.constant 1.000000e+00 : f32
    %123 = vector.broadcast %cst_35 : f32 to vector<2x32xf32>
    %124 = arith.addf %123, %122 : vector<2x32xf32>
    %125 = arith.divf %123, %124 : vector<2x32xf32>
    %126 = vector.extract_strided_slice %22 {offsets = [0, 64], sizes = [2, 32], strides = [1, 1]} : vector<2x96xf32> to vector<2x32xf32>
    %127 = vector.extract_strided_slice %109 {offsets = [0, 64], sizes = [2, 32], strides = [1, 1]} : vector<2x96xf32> to vector<2x32xf32>
    %128 = arith.mulf %117, %127 : vector<2x32xf32>
    %129 = arith.addf %126, %128 : vector<2x32xf32>
    %130 = math.tanh %129 : vector<2x32xf32>
    %cst_36 = arith.constant 1.000000e+00 : f32
    %131 = vector.broadcast %cst_36 : f32 to vector<2x32xf32>
    %132 = arith.subf %131, %125 : vector<2x32xf32>
    %133 = arith.mulf %132, %130 : vector<2x32xf32>
    %134 = arith.mulf %125, %107 : vector<2x32xf32>
    %135 = arith.addf %133, %134 : vector<2x32xf32>
    %cst_37 = arith.constant dense<0.000000e+00> : vector<2x96xf32>
    %136 = tpu.matmul %135, %3, %cst_37 {dimension_numbers = #tpu.dot_dimension_numbers<[1], [0], [0], [1], [0, 0, 1, 1], [], []>} : vector<2x32xf32>, vector<32x96xf32>, vector<2x96xf32> -> vector<2x96xf32>
    %137 = arith.addf %136, %7 : vector<2x96xf32>
    %138 = vector.extract_strided_slice %34 {offsets = [0, 0], sizes = [2, 32], strides = [1, 1]} : vector<2x96xf32> to vector<2x32xf32>
    %139 = vector.extract_strided_slice %137 {offsets = [0, 0], sizes = [2, 32], strides = [1, 1]} : vector<2x96xf32> to vector<2x32xf32>
    %140 = arith.addf %138, %139 : vector<2x32xf32>
    %141 = arith.negf %140 : vector<2x32xf32>
    %142 = math.exp %141 : vector<2x32xf32>
    %cst_38 = arith.constant 1.000000e+00 : f32
    %143 = vector.broadcast %cst_38 : f32 to vector<2x32xf32>
    %144 = arith.addf %143, %142 : vector<2x32xf32>
    %145 = arith.divf %143, %144 : vector<2x32xf32>
    %146 = vector.extract_strided_slice %34 {offsets = [0, 32], sizes = [2, 32], strides = [1, 1]} : vector<2x96xf32> to vector<2x32xf32>
    %147 = vector.extract_strided_slice %137 {offsets = [0, 32], sizes = [2, 32], strides = [1, 1]} : vector<2x96xf32> to vector<2x32xf32>
    %148 = arith.addf %146, %147 : vector<2x32xf32>
    %149 = arith.negf %148 : vector<2x32xf32>
    %150 = math.exp %149 : vector<2x32xf32>
    %cst_39 = arith.constant 1.000000e+00 : f32
    %151 = vector.broadcast %cst_39 : f32 to vector<2x32xf32>
    %152 = arith.addf %151, %150 : vector<2x32xf32>
    %153 = arith.divf %151, %152 : vector<2x32xf32>
    %154 = vector.extract_strided_slice %34 {offsets = [0, 64], sizes = [2, 32], strides = [1, 1]} : vector<2x96xf32> to vector<2x32xf32>
    %155 = vector.extract_strided_slice %137 {offsets = [0, 64], sizes = [2, 32], strides = [1, 1]} : vector<2x96xf32> to vector<2x32xf32>
    %156 = arith.mulf %145, %155 : vector<2x32xf32>
    %157 = arith.addf %154, %156 : vector<2x32xf32>
    %158 = math.tanh %157 : vector<2x32xf32>
    %cst_40 = arith.constant 1.000000e+00 : f32
    %159 = vector.broadcast %cst_40 : f32 to vector<2x32xf32>
    %160 = arith.subf %159, %153 : vector<2x32xf32>
    %161 = arith.mulf %160, %158 : vector<2x32xf32>
    %162 = arith.mulf %153, %135 : vector<2x32xf32>
    %163 = arith.addf %161, %162 : vector<2x32xf32>
    %cst_41 = arith.constant dense<0.000000e+00> : vector<2x96xf32>
    %164 = tpu.matmul %163, %3, %cst_41 {dimension_numbers = #tpu.dot_dimension_numbers<[1], [0], [0], [1], [0, 0, 1, 1], [], []>} : vector<2x32xf32>, vector<32x96xf32>, vector<2x96xf32> -> vector<2x96xf32>
    %165 = arith.addf %164, %7 : vector<2x96xf32>
    %166 = vector.extract_strided_slice %46 {offsets = [0, 0], sizes = [2, 32], strides = [1, 1]} : vector<2x96xf32> to vector<2x32xf32>
    %167 = vector.extract_strided_slice %165 {offsets = [0, 0], sizes = [2, 32], strides = [1, 1]} : vector<2x96xf32> to vector<2x32xf32>
    %168 = arith.addf %166, %167 : vector<2x32xf32>
    %169 = arith.negf %168 : vector<2x32xf32>
    %170 = math.exp %169 : vector<2x32xf32>
    %cst_42 = arith.constant 1.000000e+00 : f32
    %171 = vector.broadcast %cst_42 : f32 to vector<2x32xf32>
    %172 = arith.addf %171, %170 : vector<2x32xf32>
    %173 = arith.divf %171, %172 : vector<2x32xf32>
    %174 = vector.extract_strided_slice %46 {offsets = [0, 32], sizes = [2, 32], strides = [1, 1]} : vector<2x96xf32> to vector<2x32xf32>
    %175 = vector.extract_strided_slice %165 {offsets = [0, 32], sizes = [2, 32], strides = [1, 1]} : vector<2x96xf32> to vector<2x32xf32>
    %176 = arith.addf %174, %175 : vector<2x32xf32>
    %177 = arith.negf %176 : vector<2x32xf32>
    %178 = math.exp %177 : vector<2x32xf32>
    %cst_43 = arith.constant 1.000000e+00 : f32
    %179 = vector.broadcast %cst_43 : f32 to vector<2x32xf32>
    %180 = arith.addf %179, %178 : vector<2x32xf32>
    %181 = arith.divf %179, %180 : vector<2x32xf32>
    %182 = vector.extract_strided_slice %46 {offsets = [0, 64], sizes = [2, 32], strides = [1, 1]} : vector<2x96xf32> to vector<2x32xf32>
    %183 = vector.extract_strided_slice %165 {offsets = [0, 64], sizes = [2, 32], strides = [1, 1]} : vector<2x96xf32> to vector<2x32xf32>
    %184 = arith.mulf %173, %183 : vector<2x32xf32>
    %185 = arith.addf %182, %184 : vector<2x32xf32>
    %186 = math.tanh %185 : vector<2x32xf32>
    %cst_44 = arith.constant 1.000000e+00 : f32
    %187 = vector.broadcast %cst_44 : f32 to vector<2x32xf32>
    %188 = arith.subf %187, %181 : vector<2x32xf32>
    %189 = arith.mulf %188, %186 : vector<2x32xf32>
    %190 = arith.mulf %181, %163 : vector<2x32xf32>
    %191 = arith.addf %189, %190 : vector<2x32xf32>
    %cst_45 = arith.constant dense<0.000000e+00> : vector<2x96xf32>
    %192 = tpu.matmul %191, %3, %cst_45 {dimension_numbers = #tpu.dot_dimension_numbers<[1], [0], [0], [1], [0, 0, 1, 1], [], []>} : vector<2x32xf32>, vector<32x96xf32>, vector<2x96xf32> -> vector<2x96xf32>
    %193 = arith.addf %192, %7 : vector<2x96xf32>
    %194 = vector.extract_strided_slice %58 {offsets = [0, 0], sizes = [2, 32], strides = [1, 1]} : vector<2x96xf32> to vector<2x32xf32>
    %195 = vector.extract_strided_slice %193 {offsets = [0, 0], sizes = [2, 32], strides = [1, 1]} : vector<2x96xf32> to vector<2x32xf32>
    %196 = arith.addf %194, %195 : vector<2x32xf32>
    %197 = arith.negf %196 : vector<2x32xf32>
    %198 = math.exp %197 : vector<2x32xf32>
    %cst_46 = arith.constant 1.000000e+00 : f32
    %199 = vector.broadcast %cst_46 : f32 to vector<2x32xf32>
    %200 = arith.addf %199, %198 : vector<2x32xf32>
    %201 = arith.divf %199, %200 : vector<2x32xf32>
    %202 = vector.extract_strided_slice %58 {offsets = [0, 32], sizes = [2, 32], strides = [1, 1]} : vector<2x96xf32> to vector<2x32xf32>
    %203 = vector.extract_strided_slice %193 {offsets = [0, 32], sizes = [2, 32], strides = [1, 1]} : vector<2x96xf32> to vector<2x32xf32>
    %204 = arith.addf %202, %203 : vector<2x32xf32>
    %205 = arith.negf %204 : vector<2x32xf32>
    %206 = math.exp %205 : vector<2x32xf32>
    %cst_47 = arith.constant 1.000000e+00 : f32
    %207 = vector.broadcast %cst_47 : f32 to vector<2x32xf32>
    %208 = arith.addf %207, %206 : vector<2x32xf32>
    %209 = arith.divf %207, %208 : vector<2x32xf32>
    %210 = vector.extract_strided_slice %58 {offsets = [0, 64], sizes = [2, 32], strides = [1, 1]} : vector<2x96xf32> to vector<2x32xf32>
    %211 = vector.extract_strided_slice %193 {offsets = [0, 64], sizes = [2, 32], strides = [1, 1]} : vector<2x96xf32> to vector<2x32xf32>
    %212 = arith.mulf %201, %211 : vector<2x32xf32>
    %213 = arith.addf %210, %212 : vector<2x32xf32>
    %214 = math.tanh %213 : vector<2x32xf32>
    %cst_48 = arith.constant 1.000000e+00 : f32
    %215 = vector.broadcast %cst_48 : f32 to vector<2x32xf32>
    %216 = arith.subf %215, %209 : vector<2x32xf32>
    %217 = arith.mulf %216, %214 : vector<2x32xf32>
    %218 = arith.mulf %209, %191 : vector<2x32xf32>
    %219 = arith.addf %217, %218 : vector<2x32xf32>
    %cst_49 = arith.constant dense<0.000000e+00> : vector<2x96xf32>
    %220 = tpu.matmul %219, %3, %cst_49 {dimension_numbers = #tpu.dot_dimension_numbers<[1], [0], [0], [1], [0, 0, 1, 1], [], []>} : vector<2x32xf32>, vector<32x96xf32>, vector<2x96xf32> -> vector<2x96xf32>
    %221 = arith.addf %220, %7 : vector<2x96xf32>
    %222 = vector.extract_strided_slice %70 {offsets = [0, 0], sizes = [2, 32], strides = [1, 1]} : vector<2x96xf32> to vector<2x32xf32>
    %223 = vector.extract_strided_slice %221 {offsets = [0, 0], sizes = [2, 32], strides = [1, 1]} : vector<2x96xf32> to vector<2x32xf32>
    %224 = arith.addf %222, %223 : vector<2x32xf32>
    %225 = arith.negf %224 : vector<2x32xf32>
    %226 = math.exp %225 : vector<2x32xf32>
    %cst_50 = arith.constant 1.000000e+00 : f32
    %227 = vector.broadcast %cst_50 : f32 to vector<2x32xf32>
    %228 = arith.addf %227, %226 : vector<2x32xf32>
    %229 = arith.divf %227, %228 : vector<2x32xf32>
    %230 = vector.extract_strided_slice %70 {offsets = [0, 32], sizes = [2, 32], strides = [1, 1]} : vector<2x96xf32> to vector<2x32xf32>
    %231 = vector.extract_strided_slice %221 {offsets = [0, 32], sizes = [2, 32], strides = [1, 1]} : vector<2x96xf32> to vector<2x32xf32>
    %232 = arith.addf %230, %231 : vector<2x32xf32>
    %233 = arith.negf %232 : vector<2x32xf32>
    %234 = math.exp %233 : vector<2x32xf32>
    %cst_51 = arith.constant 1.000000e+00 : f32
    %235 = vector.broadcast %cst_51 : f32 to vector<2x32xf32>
    %236 = arith.addf %235, %234 : vector<2x32xf32>
    %237 = arith.divf %235, %236 : vector<2x32xf32>
    %238 = vector.extract_strided_slice %70 {offsets = [0, 64], sizes = [2, 32], strides = [1, 1]} : vector<2x96xf32> to vector<2x32xf32>
    %239 = vector.extract_strided_slice %221 {offsets = [0, 64], sizes = [2, 32], strides = [1, 1]} : vector<2x96xf32> to vector<2x32xf32>
    %240 = arith.mulf %229, %239 : vector<2x32xf32>
    %241 = arith.addf %238, %240 : vector<2x32xf32>
    %242 = math.tanh %241 : vector<2x32xf32>
    %cst_52 = arith.constant 1.000000e+00 : f32
    %243 = vector.broadcast %cst_52 : f32 to vector<2x32xf32>
    %244 = arith.subf %243, %237 : vector<2x32xf32>
    %245 = arith.mulf %244, %242 : vector<2x32xf32>
    %246 = arith.mulf %237, %219 : vector<2x32xf32>
    %247 = arith.addf %245, %246 : vector<2x32xf32>
    %cst_53 = arith.constant dense<0.000000e+00> : vector<2x96xf32>
    %248 = tpu.matmul %247, %3, %cst_53 {dimension_numbers = #tpu.dot_dimension_numbers<[1], [0], [0], [1], [0, 0, 1, 1], [], []>} : vector<2x32xf32>, vector<32x96xf32>, vector<2x96xf32> -> vector<2x96xf32>
    %249 = arith.addf %248, %7 : vector<2x96xf32>
    %250 = vector.extract_strided_slice %82 {offsets = [0, 0], sizes = [2, 32], strides = [1, 1]} : vector<2x96xf32> to vector<2x32xf32>
    %251 = vector.extract_strided_slice %249 {offsets = [0, 0], sizes = [2, 32], strides = [1, 1]} : vector<2x96xf32> to vector<2x32xf32>
    %252 = arith.addf %250, %251 : vector<2x32xf32>
    %253 = arith.negf %252 : vector<2x32xf32>
    %254 = math.exp %253 : vector<2x32xf32>
    %cst_54 = arith.constant 1.000000e+00 : f32
    %255 = vector.broadcast %cst_54 : f32 to vector<2x32xf32>
    %256 = arith.addf %255, %254 : vector<2x32xf32>
    %257 = arith.divf %255, %256 : vector<2x32xf32>
    %258 = vector.extract_strided_slice %82 {offsets = [0, 32], sizes = [2, 32], strides = [1, 1]} : vector<2x96xf32> to vector<2x32xf32>
    %259 = vector.extract_strided_slice %249 {offsets = [0, 32], sizes = [2, 32], strides = [1, 1]} : vector<2x96xf32> to vector<2x32xf32>
    %260 = arith.addf %258, %259 : vector<2x32xf32>
    %261 = arith.negf %260 : vector<2x32xf32>
    %262 = math.exp %261 : vector<2x32xf32>
    %cst_55 = arith.constant 1.000000e+00 : f32
    %263 = vector.broadcast %cst_55 : f32 to vector<2x32xf32>
    %264 = arith.addf %263, %262 : vector<2x32xf32>
    %265 = arith.divf %263, %264 : vector<2x32xf32>
    %266 = vector.extract_strided_slice %82 {offsets = [0, 64], sizes = [2, 32], strides = [1, 1]} : vector<2x96xf32> to vector<2x32xf32>
    %267 = vector.extract_strided_slice %249 {offsets = [0, 64], sizes = [2, 32], strides = [1, 1]} : vector<2x96xf32> to vector<2x32xf32>
    %268 = arith.mulf %257, %267 : vector<2x32xf32>
    %269 = arith.addf %266, %268 : vector<2x32xf32>
    %270 = math.tanh %269 : vector<2x32xf32>
    %cst_56 = arith.constant 1.000000e+00 : f32
    %271 = vector.broadcast %cst_56 : f32 to vector<2x32xf32>
    %272 = arith.subf %271, %265 : vector<2x32xf32>
    %273 = arith.mulf %272, %270 : vector<2x32xf32>
    %274 = arith.mulf %265, %247 : vector<2x32xf32>
    %275 = arith.addf %273, %274 : vector<2x32xf32>
    %cst_57 = arith.constant dense<0.000000e+00> : vector<2x96xf32>
    %276 = tpu.matmul %275, %3, %cst_57 {dimension_numbers = #tpu.dot_dimension_numbers<[1], [0], [0], [1], [0, 0, 1, 1], [], []>} : vector<2x32xf32>, vector<32x96xf32>, vector<2x96xf32> -> vector<2x96xf32>
    %277 = arith.addf %276, %7 : vector<2x96xf32>
    %278 = vector.extract_strided_slice %94 {offsets = [0, 0], sizes = [2, 32], strides = [1, 1]} : vector<2x96xf32> to vector<2x32xf32>
    %279 = vector.extract_strided_slice %277 {offsets = [0, 0], sizes = [2, 32], strides = [1, 1]} : vector<2x96xf32> to vector<2x32xf32>
    %280 = arith.addf %278, %279 : vector<2x32xf32>
    %281 = arith.negf %280 : vector<2x32xf32>
    %282 = math.exp %281 : vector<2x32xf32>
    %cst_58 = arith.constant 1.000000e+00 : f32
    %283 = vector.broadcast %cst_58 : f32 to vector<2x32xf32>
    %284 = arith.addf %283, %282 : vector<2x32xf32>
    %285 = arith.divf %283, %284 : vector<2x32xf32>
    %286 = vector.extract_strided_slice %94 {offsets = [0, 32], sizes = [2, 32], strides = [1, 1]} : vector<2x96xf32> to vector<2x32xf32>
    %287 = vector.extract_strided_slice %277 {offsets = [0, 32], sizes = [2, 32], strides = [1, 1]} : vector<2x96xf32> to vector<2x32xf32>
    %288 = arith.addf %286, %287 : vector<2x32xf32>
    %289 = arith.negf %288 : vector<2x32xf32>
    %290 = math.exp %289 : vector<2x32xf32>
    %cst_59 = arith.constant 1.000000e+00 : f32
    %291 = vector.broadcast %cst_59 : f32 to vector<2x32xf32>
    %292 = arith.addf %291, %290 : vector<2x32xf32>
    %293 = arith.divf %291, %292 : vector<2x32xf32>
    %294 = vector.extract_strided_slice %94 {offsets = [0, 64], sizes = [2, 32], strides = [1, 1]} : vector<2x96xf32> to vector<2x32xf32>
    %295 = vector.extract_strided_slice %277 {offsets = [0, 64], sizes = [2, 32], strides = [1, 1]} : vector<2x96xf32> to vector<2x32xf32>
    %296 = arith.mulf %285, %295 : vector<2x32xf32>
    %297 = arith.addf %294, %296 : vector<2x32xf32>
    %298 = math.tanh %297 : vector<2x32xf32>
    %cst_60 = arith.constant 1.000000e+00 : f32
    %299 = vector.broadcast %cst_60 : f32 to vector<2x32xf32>
    %300 = arith.subf %299, %293 : vector<2x32xf32>
    %301 = arith.mulf %300, %298 : vector<2x32xf32>
    %302 = arith.mulf %293, %275 : vector<2x32xf32>
    %303 = arith.addf %301, %302 : vector<2x32xf32>
    %cst_61 = arith.constant dense<0.000000e+00> : vector<2x96xf32>
    %304 = tpu.matmul %303, %3, %cst_61 {dimension_numbers = #tpu.dot_dimension_numbers<[1], [0], [0], [1], [0, 0, 1, 1], [], []>} : vector<2x32xf32>, vector<32x96xf32>, vector<2x96xf32> -> vector<2x96xf32>
    %305 = arith.addf %304, %7 : vector<2x96xf32>
    %306 = vector.extract_strided_slice %106 {offsets = [0, 0], sizes = [2, 32], strides = [1, 1]} : vector<2x96xf32> to vector<2x32xf32>
    %307 = vector.extract_strided_slice %305 {offsets = [0, 0], sizes = [2, 32], strides = [1, 1]} : vector<2x96xf32> to vector<2x32xf32>
    %308 = arith.addf %306, %307 : vector<2x32xf32>
    %309 = arith.negf %308 : vector<2x32xf32>
    %310 = math.exp %309 : vector<2x32xf32>
    %cst_62 = arith.constant 1.000000e+00 : f32
    %311 = vector.broadcast %cst_62 : f32 to vector<2x32xf32>
    %312 = arith.addf %311, %310 : vector<2x32xf32>
    %313 = arith.divf %311, %312 : vector<2x32xf32>
    %314 = vector.extract_strided_slice %106 {offsets = [0, 32], sizes = [2, 32], strides = [1, 1]} : vector<2x96xf32> to vector<2x32xf32>
    %315 = vector.extract_strided_slice %305 {offsets = [0, 32], sizes = [2, 32], strides = [1, 1]} : vector<2x96xf32> to vector<2x32xf32>
    %316 = arith.addf %314, %315 : vector<2x32xf32>
    %317 = arith.negf %316 : vector<2x32xf32>
    %318 = math.exp %317 : vector<2x32xf32>
    %cst_63 = arith.constant 1.000000e+00 : f32
    %319 = vector.broadcast %cst_63 : f32 to vector<2x32xf32>
    %320 = arith.addf %319, %318 : vector<2x32xf32>
    %321 = arith.divf %319, %320 : vector<2x32xf32>
    %322 = vector.extract_strided_slice %106 {offsets = [0, 64], sizes = [2, 32], strides = [1, 1]} : vector<2x96xf32> to vector<2x32xf32>
    %323 = vector.extract_strided_slice %305 {offsets = [0, 64], sizes = [2, 32], strides = [1, 1]} : vector<2x96xf32> to vector<2x32xf32>
    %324 = arith.mulf %313, %323 : vector<2x32xf32>
    %325 = arith.addf %322, %324 : vector<2x32xf32>
    %326 = math.tanh %325 : vector<2x32xf32>
    %cst_64 = arith.constant 1.000000e+00 : f32
    %327 = vector.broadcast %cst_64 : f32 to vector<2x32xf32>
    %328 = arith.subf %327, %321 : vector<2x32xf32>
    %329 = arith.mulf %328, %326 : vector<2x32xf32>
    %330 = arith.mulf %321, %303 : vector<2x32xf32>
    %331 = arith.addf %329, %330 : vector<2x32xf32>
    %c0_65 = arith.constant 0 : index
    %c0_66 = arith.constant 0 : index
    %332 = vector.load %arg9[%c0_65, %c0_66] : memref<2x32xf32, #tpu.memory_space<vmem>>, vector<2x32xf32>
    tpu.vector_store %arg9[%c0_65, %c0_66], %331 {strides = array<i32>} : memref<2x32xf32, #tpu.memory_space<vmem>>, vector<2x32xf32>,
    return
  }
}

</mosaic_0001>

<llo_original>
// kernel: gru_context_pallas.1
$region0: #{gru_context_pallas.1}
  #allocation0 [shape = 'u32[]', space=smem, size = 0x4, offset = 0x4, fixed_abs, tag = 'smem constant byte address 0x4 - core index']
  #allocation1 [shape = 'u32[144,128]{1,0:T(1,128)}', space=vmem, size = 0x12000, scoped, tag = 'internal scratch']
  %s0 = inlined_call_operand.hbm [shape: f32[2,32], index: 0, kind: input, shape index: {}]
  %s1 = inlined_call_operand.vmem [shape: f32[2,8], index: 1, kind: input, shape index: {}]
  %s2 = inlined_call_operand.hbm [shape: f32[2,88], index: 2, kind: input, shape index: {}]
  %s3 = inlined_call_operand.hbm [shape: f32[4,96], index: 3, kind: input, shape index: {}]
  %s4 = inlined_call_operand.hbm [shape: f32[1,96], index: 4, kind: input, shape index: {}]
  %s5 = inlined_call_operand.vmem [shape: f32[11,96], index: 5, kind: input, shape index: {}]
  %s6 = inlined_call_operand.hbm [shape: f32[32,96], index: 6, kind: input, shape index: {}]
  %s7 = inlined_call_operand.vmem [shape: f32[1,96], index: 7, kind: input, shape index: {}]
  %s8 = inlined_call_operand.vmem [shape: f32[1,96], index: 8, kind: input, shape index: {}]
  %s9 = inlined_call_operand.hbm [shape: f32[2,32], index: 9, kind: output, shape index: {}]
  %s10 = sld [smem:[#allocation0]]
  $region66: #{gru_context_pallas.1} parent=0
    _
  %s12 = ssub.s32 1, %s10
  %s13 = scalar_select 0, %s12, %s10
  $region1: #{gru_context_pallas.1} parent=0
    #allocation2 [shape = 'u8[1024]{0}', space=vmem, size = 0x400, scoped, tag = 'input window, operand 0, single buffered']
    #allocation3 [shape = 's32[1]{0}', space=sflag, size = 0x4, scoped, tag = 'scoped memory for gru_context_pallas.1']
    #allocation4 [shape = 's32[1]{0}', space=sflag, size = 0x4, scoped, tag = 'scoped memory for gru_context_pallas.1']
    #allocation5 [shape = 'u8[1024]{0}', space=vmem, size = 0x400, scoped, tag = 'input window, operand 2, single buffered']
    #allocation6 [shape = 's32[1]{0}', space=sflag, size = 0x4, scoped, tag = 'scoped memory for gru_context_pallas.1']
    #allocation7 [shape = 'u8[2048]{0}', space=vmem, size = 0x800, scoped, tag = 'input window, operand 3, single buffered']
    #allocation8 [shape = 'u8[512]{0}', space=vmem, size = 0x400, scoped, tag = 'input window, operand 4, single buffered']
    #allocation9 [shape = 's32[1]{0}', space=sflag, size = 0x4, scoped, tag = 'scoped memory for gru_context_pallas.1']
    #allocation10 [shape = 'u8[16384]{0}', space=vmem, size = 0x4000, scoped, tag = 'input window, operand 6, single buffered']
    #allocation11 [shape = 'u8[1024]{0}', space=vmem, size = 0x400, scoped, tag = 'output window, operand 0, single buffered']
    %14 = vsyncpa [#allocation3], 0
    %15 = vsyncpa [#allocation6], 0
    %16 = vsyncpa [#allocation9], 0
    %17 = vsyncpa [#allocation4], 0
    // Predicated region
    $region2: #{gru_context_pallas.1} parent=1 // pred_check
      _
    $region3: #{gru_context_pallas.1} parent=1 // pred_check_branch
      %19 = sbr.rel (0) target = $region5
    $region4: #{gru_context_pallas.1} parent=1 // pred_region
      %s21 = ssub.s32 32, 32
      %22 = vsyncadd [#allocation3], %s21
      %s24 = sshll.u32 [#allocation2], 4
      %s25 = int_to_ptr.vmem [resolvable:$true] %s24
      %27 = dma.hbm_to_vmem [thread:$0]  %s0, 32, %s25, [#allocation3]
    $region5: #{gru_context_pallas.1} parent=1 // pred_fallthru
      _
    // Predicated region
    $region6: #{gru_context_pallas.1} parent=1 // pred_check
      _
    $region7: #{gru_context_pallas.1} parent=1 // pred_check_branch
      %29 = sbr.rel (0) target = $region9
    $region8: #{gru_context_pallas.1} parent=1 // pred_region
      _
    $region9: #{gru_context_pallas.1} parent=1 // pred_fallthru
      _
    // Predicated region
    $region10: #{gru_context_pallas.1} parent=1 // pred_check
      _
    $region11: #{gru_context_pallas.1} parent=1 // pred_check_branch
      %31 = sbr.rel (0) target = $region13
    $region12: #{gru_context_pallas.1} parent=1 // pred_region
      %s33 = ssub.s32 32, 32
      %34 = vsyncadd [#allocation6], %s33
      %s36 = sshll.u32 [#allocation5], 4
      %s37 = int_to_ptr.vmem [resolvable:$true] %s36
      %39 = dma.hbm_to_vmem [thread:$0]  %s2, 32, %s37, [#allocation6]
    $region13: #{gru_context_pallas.1} parent=1 // pred_fallthru
      _
    // Predicated region
    $region14: #{gru_context_pallas.1} parent=1 // pred_check
      _
    $region15: #{gru_context_pallas.1} parent=1 // pred_check_branch
      %41 = sbr.rel (0) target = $region17
    $region16: #{gru_context_pallas.1} parent=1 // pred_region
      %s43 = ssub.s32 64, 64
      %44 = vsyncadd [#allocation6], %s43
      %s46 = sshll.u32 [#allocation7], 4
      %s47 = int_to_ptr.vmem [resolvable:$true] %s46
      %49 = dma.hbm_to_vmem [thread:$0]  %s3, 64, %s47, [#allocation6]
    $region17: #{gru_context_pallas.1} parent=1 // pred_fallthru
      _
    // Predicated region
    $region18: #{gru_context_pallas.1} parent=1 // pred_check
      _
    $region19: #{gru_context_pallas.1} parent=1 // pred_check_branch
      %51 = sbr.rel (0) target = $region21
    $region20: #{gru_context_pallas.1} parent=1 // pred_region
      %s53 = ssub.s32 16, 16
      %54 = vsyncadd [#allocation9], %s53
      %s56 = sshll.u32 [#allocation8], 4
      %s57 = int_to_ptr.vmem [resolvable:$true] %s56
      %59 = dma.hbm_to_vmem [thread:$0]  %s4, 16, %s57, [#allocation9]
    $region21: #{gru_context_pallas.1} parent=1 // pred_fallthru
      _
    // Predicated region
    $region22: #{gru_context_pallas.1} parent=1 // pred_check
      _
    $region23: #{gru_context_pallas.1} parent=1 // pred_check_branch
      %61 = sbr.rel (0) target = $region25
    $region24: #{gru_context_pallas.1} parent=1 // pred_region
      _
    $region25: #{gru_context_pallas.1} parent=1 // pred_fallthru
      _
    // Predicated region
    $region26: #{gru_context_pallas.1} parent=1 // pred_check
      _
    $region27: #{gru_context_pallas.1} parent=1 // pred_check_branch
      %63 = sbr.rel (0) target = $region29
    $region28: #{gru_context_pallas.1} parent=1 // pred_region
      %s65 = ssub.s32 512, 512
      %66 = vsyncadd [#allocation9], %s65
      %s67 = sshll.u32 [#allocation10], 4
      %s68 = int_to_ptr.vmem [resolvable:$true] %s67
      %73 = dma.hbm_to_vmem [thread:$0]  %s6, 512, %s68, [#allocation9], 128, 128, 8
    $region29: #{gru_context_pallas.1} parent=1 // pred_fallthru
      _
    // Predicated region
    $region30: #{gru_context_pallas.1} parent=1 // pred_check
      _
    $region31: #{gru_context_pallas.1} parent=1 // pred_check_branch
      %75 = sbr.rel (0) target = $region33
    $region32: #{gru_context_pallas.1} parent=1 // pred_region
      _
    $region33: #{gru_context_pallas.1} parent=1 // pred_fallthru
      _
    // Predicated region
    $region34: #{gru_context_pallas.1} parent=1 // pred_check
      _
    $region35: #{gru_context_pallas.1} parent=1 // pred_check_branch
      %77 = sbr.rel (0) target = $region37
    $region36: #{gru_context_pallas.1} parent=1 // pred_region
      _
    $region37: #{gru_context_pallas.1} parent=1 // pred_fallthru
      _
    // Predicated region
    $region38: #{gru_context_pallas.1} parent=1 // pred_check
      _
    $region39: #{gru_context_pallas.1} parent=1 // pred_check_branch
      %79 = sbr.rel (0) target = $region41
    $region40: #{gru_context_pallas.1} parent=1 // pred_region
      %80 = dma.done [#allocation3], 32
    $region41: #{gru_context_pallas.1} parent=1 // pred_fallthru
      _
    // Predicated region
    $region42: #{gru_context_pallas.1} parent=1 // pred_check
      _
    $region43: #{gru_context_pallas.1} parent=1 // pred_check_branch
      %82 = sbr.rel (0) target = $region45
    $region44: #{gru_context_pallas.1} parent=1 // pred_region
      %83 = dma.done [#allocation6], 32
    $region45: #{gru_context_pallas.1} parent=1 // pred_fallthru
      _
    // Predicated region
    $region46: #{gru_context_pallas.1} parent=1 // pred_check
      _
    $region47: #{gru_context_pallas.1} parent=1 // pred_check_branch
      %85 = sbr.rel (0) target = $region49
    $region48: #{gru_context_pallas.1} parent=1 // pred_region
      %86 = dma.done [#allocation6], 64
    $region49: #{gru_context_pallas.1} parent=1 // pred_fallthru
      _
    // Predicated region
    $region50: #{gru_context_pallas.1} parent=1 // pred_check
      _
    $region51: #{gru_context_pallas.1} parent=1 // pred_check_branch
      %88 = sbr.rel (0) target = $region53
    $region52: #{gru_context_pallas.1} parent=1 // pred_region
      %89 = dma.done [#allocation9], 16
    $region53: #{gru_context_pallas.1} parent=1 // pred_fallthru
      _
    // Predicated region
    $region54: #{gru_context_pallas.1} parent=1 // pred_check
      _
    $region55: #{gru_context_pallas.1} parent=1 // pred_check_branch
      %91 = sbr.rel (0) target = $region57
    $region56: #{gru_context_pallas.1} parent=1 // pred_region
      %92 = dma.done [#allocation9], 512
    $region57: #{gru_context_pallas.1} parent=1 // pred_fallthru
      _
    %v93 = vld [vmem:[#allocation7] sm:$0xf]
    %v94 = vld [vmem:[#allocation8] sm:$0x1]
    %v95 = vld [vmem:[%s5] sm:$0xff]
    %v96 = vld [vmem:[%s5 + $0x8] sm:$0x7]
    %v97 = vld [vmem:[#allocation10] sm:$0xff]
    %v98 = vld [vmem:[#allocation10 + $0x8] sm:$0xff]
    %v99 = vld [vmem:[#allocation10 + $0x10] sm:$0xff]
    %v100 = vld [vmem:[#allocation10 + $0x18] sm:$0xff]
    %v101 = vld [vmem:[%s7] sm:$0x1]
    %v102 = vld [vmem:[%s8] sm:$0x1]
    %v104 = vlaneseq
    %v105 = vshrl.u32 %v104, 7
    %v106 = vsub.s32 0, %v105
    %v107 = vrot.slane %v102, %v106
    %v109 = vld [vmem:[#allocation2] sm:$0x3]
    %v110 = vld [vmem:[%s1] sm:$0x3]
    %v111 = vld [vmem:[#allocation5] sm:$0x3]
    %113 = vset.pattern.permute.xlu0 0
    %114 = vperm.xlu0 %113, %v110
    %v115 = vpop.permute.xlu0 %114
    %v118 = vlaneseq
    %v119 = vshrl.u32 %v118, 7
    %v120 = vsub.s32 0, %v119
    %v121 = vrot.slane %v94, %v120
    %v123 = vmul.f32 %v115, %v121
    %vm124 = vcmask 31744
    %v126 = vsel %vm124, %v109, 0
    %vm128 = vcmask 1043456
    %v130 = vsel %vm128, %v93, 0
    %132 = vmatprep.subr.mxu0 0.0
    %133 = vmatpush1.msra.mxu0 %v130
    %134 = vmatprep.subr.mxu0 0.0
    %135 = vmatpush1.msra.mxu0 0.0
    %136 = vmatprep.subr.mxu0 0.0
    %137 = vmatpush1.msra.mxu0 0.0
    %138 = vmatprep.subr.mxu0 0.0
    %139 = vmatpush1.msra.mxu0 0.0
    %140 = vmatprep.subr.mxu0 0.0
    %141 = vmatpush1.msra.mxu0 0.0
    %142 = vmatprep.subr.mxu0 0.0
    %143 = vmatpush1.msra.mxu0 0.0
    %144 = vmatprep.subr.mxu0 0.0
    %145 = vmatpush1.msra.mxu0 0.0
    %146 = vmatprep.subr.mxu0 0.0
    %147 = vmatpush1.msra.mxu0 0.0
    %148 = vmatprep.subr.mxu0 0.0
    %149 = vmatpush1.msra.mxu0 0.0
    %150 = vmatprep.subr.mxu0 0.0
    %151 = vmatpush1.msra.mxu0 0.0
    %152 = vmatprep.subr.mxu0 0.0
    %153 = vmatpush1.msra.mxu0 0.0
    %154 = vmatprep.subr.mxu0 0.0
    %155 = vmatpush1.msra.mxu0 0.0
    %156 = vmatprep.subr.mxu0 0.0
    %157 = vmatpush1.msra.mxu0 0.0
    %158 = vmatprep.subr.mxu0 0.0
    %159 = vmatpush1.msra.mxu0 0.0
    %160 = vmatprep.subr.mxu0 0.0
    %161 = vmatpush1.msra.mxu0 0.0
    %162 = vmatprep.subr.mxu0 0.0
    %163 = vmatpush1.msra.mxu0 0.0
    %164 = vmatprep.subr.mxu0 0.0
    %165 = vmatpush1.msra.mxu0 0.0
    %166 = vmatprep.subr.mxu0 0.0
    %167 = vmatpush1.msra.mxu0 0.0
    %168 = vmatprep.subr.mxu0 0.0
    %169 = vmatpush1.msra.mxu0 0.0
    %170 = vmatprep.subr.mxu0 0.0
    %171 = vmatpush1.msra.mxu0 0.0
    %172 = vmatprep.subr.mxu0 0.0
    %173 = vmatpush1.msra.mxu0 0.0
    %174 = vmatprep.subr.mxu0 0.0
    %175 = vmatpush1.msra.mxu0 0.0
    %176 = vmatprep.subr.mxu0 0.0
    %177 = vmatpush1.msra.mxu0 0.0
    %178 = vmatprep.subr.mxu0 0.0
    %179 = vmatpush1.msra.mxu0 0.0
    %180 = vmatprep.subr.mxu0 0.0
    %181 = vmatpush1.msra.mxu0 0.0
    %182 = vmatprep.subr.mxu0 0.0
    %183 = vmatpush1.msra.mxu0 0.0
    %184 = vmatprep.subr.mxu0 0.0
    %185 = vmatpush1.msra.mxu0 0.0
    %186 = vmatprep.subr.mxu0 0.0
    %187 = vmatpush1.msra.mxu0 0.0
    %188 = vmatprep.subr.mxu0 0.0
    %189 = vmatpush1.msra.mxu0 0.0
    %190 = vmatprep.subr.mxu0 0.0
    %191 = vmatpush1.msra.mxu0 0.0
    %192 = vmatprep.subr.mxu0 0.0
    %193 = vmatpush1.msra.mxu0 0.0
    %194 = vmatprep.subr.mxu0 0.0
    %195 = vmatpush1.msra.mxu0 0.0
    %196 = vmatprep.mubr.f32.mxu0 0.0
    %197 = vmatmul.mubr.f32.gmra.mrb[0].mxu0 %v126
    %v198 = vpop.f32.mrb[0].mxu0
    %v199 = vadd.f32 %v123, %v198
    %v200 = vpop.f32.mrb[0].mxu0
    %201 = vdwg.mxu0
    %vm202 = vcmask 89088
    %v204 = vsel %vm202, %v111, 0
    %vm206 = vcmask 1042432
    %v208 = vsel %vm206, %v96, 0
    %210 = vmatprep.subr.mxu0 0.0
    %211 = vmatpush1.msra.mxu0 %v95
    %212 = vmatprep.subr.mxu0 0.0
    %213 = vmatpush1.msra.mxu0 %v208
    %214 = vmatprep.subr.mxu0 0.0
    %215 = vmatpush1.msra.mxu0 0.0
    %216 = vmatprep.subr.mxu0 0.0
    %217 = vmatpush1.msra.mxu0 0.0
    %218 = vmatprep.subr.mxu0 0.0
    %219 = vmatpush1.msra.mxu0 0.0
    %220 = vmatprep.subr.mxu0 0.0
    %221 = vmatpush1.msra.mxu0 0.0
    %222 = vmatprep.subr.mxu0 0.0
    %223 = vmatpush1.msra.mxu0 0.0
    %224 = vmatprep.subr.mxu0 0.0
    %225 = vmatpush1.msra.mxu0 0.0
    %226 = vmatprep.subr.mxu0 0.0
    %227 = vmatpush1.msra.mxu0 0.0
    %228 = vmatprep.subr.mxu0 0.0
    %229 = vmatpush1.msra.mxu0 0.0
    %230 = vmatprep.subr.mxu0 0.0
    %231 = vmatpush1.msra.mxu0 0.0
    %232 = vmatprep.subr.mxu0 0.0
    %233 = vmatpush1.msra.mxu0 0.0
    %234 = vmatprep.subr.mxu0 0.0
    %235 = vmatpush1.msra.mxu0 0.0
    %236 = vmatprep.subr.mxu0 0.0
    %237 = vmatpush1.msra.mxu0 0.0
    %238 = vmatprep.subr.mxu0 0.0
    %239 = vmatpush1.msra.mxu0 0.0
    %240 = vmatprep.subr.mxu0 0.0
    %241 = vmatpush1.msra.mxu0 0.0
    %242 = vmatprep.subr.mxu0 0.0
    %243 = vmatpush1.msra.mxu0 0.0
    %244 = vmatprep.subr.mxu0 0.0
    %245 = vmatpush1.msra.mxu0 0.0
    %246 = vmatprep.subr.mxu0 0.0
    %247 = vmatpush1.msra.mxu0 0.0
    %248 = vmatprep.subr.mxu0 0.0
    %249 = vmatpush1.msra.mxu0 0.0
    %250 = vmatprep.subr.mxu0 0.0
    %251 = vmatpush1.msra.mxu0 0.0
    %252 = vmatprep.subr.mxu0 0.0
    %253 = vmatpush1.msra.mxu0 0.0
    %254 = vmatprep.subr.mxu0 0.0
    %255 = vmatpush1.msra.mxu0 0.0
    %256 = vmatprep.subr.mxu0 0.0
    %257 = vmatpush1.msra.mxu0 0.0
    %258 = vmatprep.subr.mxu0 0.0
    %259 = vmatpush1.msra.mxu0 0.0
    %260 = vmatprep.subr.mxu0 0.0
    %261 = vmatpush1.msra.mxu0 0.0
    %262 = vmatprep.subr.mxu0 0.0
    %263 = vmatpush1.msra.mxu0 0.0
    %264 = vmatprep.subr.mxu0 0.0
    %265 = vmatpush1.msra.mxu0 0.0
    %266 = vmatprep.subr.mxu0 0.0
    %267 = vmatpush1.msra.mxu0 0.0
    %268 = vmatprep.subr.mxu0 0.0
    %269 = vmatpush1.msra.mxu0 0.0
    %270 = vmatprep.subr.mxu0 0.0
    %271 = vmatpush1.msra.mxu0 0.0
    %272 = vmatprep.subr.mxu0 0.0
    %273 = vmatpush1.msra.mxu0 0.0
    %274 = vmatprep.mubr.f32.mxu0 0.0
    %275 = vmatmul.mubr.f32.gmra.mrb[0].mxu0 %v204
    %v276 = vpop.f32.mrb[0].mxu0
    %v277 = vadd.f32 0.0, %v276
    %v278 = vpop.f32.mrb[0].mxu0
    %279 = vdwg.mxu0
    %v280 = vadd.f32 %v199, %v277
    %v282 = vlaneseq
    %v283 = vshrl.u32 %v282, 7
    %v284 = vsub.s32 0, %v283
    %v285 = vrot.slane %v101, %v284
    %v287 = vadd.f32 %v280, %v285
    %288 = vset.pattern.permute.xlu0 1
    %289 = vperm.xlu0 %288, %v110
    %v290 = vpop.permute.xlu0 %289
    %v292 = vmul.f32 %v290, %v121
    %293 = vrot.lane.b32.xlu0 %v109, 124
    %v294 = vpop.permute.xlu0 %293
    %v295 = vsel %vm124, %v294, 0
    %297 = vmatprep.subr.mxu0 0.0
    %298 = vmatpush1.msra.mxu0 %v130
    %299 = vmatprep.subr.mxu0 0.0
    %300 = vmatpush1.msra.mxu0 0.0
    %301 = vmatprep.subr.mxu0 0.0
    %302 = vmatpush1.msra.mxu0 0.0
    %303 = vmatprep.subr.mxu0 0.0
    %304 = vmatpush1.msra.mxu0 0.0
    %305 = vmatprep.subr.mxu0 0.0
    %306 = vmatpush1.msra.mxu0 0.0
    %307 = vmatprep.subr.mxu0 0.0
    %308 = vmatpush1.msra.mxu0 0.0
    %309 = vmatprep.subr.mxu0 0.0
    %310 = vmatpush1.msra.mxu0 0.0
    %311 = vmatprep.subr.mxu0 0.0
    %312 = vmatpush1.msra.mxu0 0.0
    %313 = vmatprep.subr.mxu0 0.0
    %314 = vmatpush1.msra.mxu0 0.0
    %315 = vmatprep.subr.mxu0 0.0
    %316 = vmatpush1.msra.mxu0 0.0
    %317 = vmatprep.subr.mxu0 0.0
    %318 = vmatpush1.msra.mxu0 0.0
    %319 = vmatprep.subr.mxu0 0.0
    %320 = vmatpush1.msra.mxu0 0.0
    %321 = vmatprep.subr.mxu0 0.0
    %322 = vmatpush1.msra.mxu0 0.0
    %323 = vmatprep.subr.mxu0 0.0
    %324 = vmatpush1.msra.mxu0 0.0
    %325 = vmatprep.subr.mxu0 0.0
    %326 = vmatpush1.msra.mxu0 0.0
    %327 = vmatprep.subr.mxu0 0.0
    %328 = vmatpush1.msra.mxu0 0.0
    %329 = vmatprep.subr.mxu0 0.0
    %330 = vmatpush1.msra.mxu0 0.0
    %331 = vmatprep.subr.mxu0 0.0
    %332 = vmatpush1.msra.mxu0 0.0
    %333 = vmatprep.subr.mxu0 0.0
    %334 = vmatpush1.msra.mxu0 0.0
    %335 = vmatprep.subr.mxu0 0.0
    %336 = vmatpush1.msra.mxu0 0.0
    %337 = vmatprep.subr.mxu0 0.0
    %338 = vmatpush1.msra.mxu0 0.0
    %339 = vmatprep.subr.mxu0 0.0
    %340 = vmatpush1.msra.mxu0 0.0
    %341 = vmatprep.subr.mxu0 0.0
    %342 = vmatpush1.msra.mxu0 0.0
    %343 = vmatprep.subr.mxu0 0.0
    %344 = vmatpush1.msra.mxu0 0.0
    %345 = vmatprep.subr.mxu0 0.0
    %346 = vmatpush1.msra.mxu0 0.0
    %347 = vmatprep.subr.mxu0 0.0
    %348 = vmatpush1.msra.mxu0 0.0
    %349 = vmatprep.subr.mxu0 0.0
    %350 = vmatpush1.msra.mxu0 0.0
    %351 = vmatprep.subr.mxu0 0.0
    %352 = vmatpush1.msra.mxu0 0.0
    %353 = vmatprep.subr.mxu0 0.0
    %354 = vmatpush1.msra.mxu0 0.0
    %355 = vmatprep.subr.mxu0 0.0
    %356 = vmatpush1.msra.mxu0 0.0
    %357 = vmatprep.subr.mxu0 0.0
    %358 = vmatpush1.msra.mxu0 0.0
    %359 = vmatprep.subr.mxu0 0.0
    %360 = vmatpush1.msra.mxu0 0.0
    %361 = vmatprep.mubr.f32.mxu0 0.0
    %362 = vmatmul.mubr.f32.gmra.mrb[0].mxu0 %v295
    %v363 = vpop.f32.mrb[0].mxu0
    %v364 = vadd.f32 %v292, %v363
    %v365 = vpop.f32.mrb[0].mxu0
    %366 = vdwg.mxu0
    %367 = vrot.lane.b32.xlu0 %v111, 117
    %v368 = vpop.permute.xlu0 %367
    %v369 = vsel %vm202, %v368, 0
    %371 = vmatprep.subr.mxu0 0.0
    %372 = vmatpush1.msra.mxu0 %v95
    %373 = vmatprep.subr.mxu0 0.0
    %374 = vmatpush1.msra.mxu0 %v208
    %375 = vmatprep.subr.mxu0 0.0
    %376 = vmatpush1.msra.mxu0 0.0
    %377 = vmatprep.subr.mxu0 0.0
    %378 = vmatpush1.msra.mxu0 0.0
    %379 = vmatprep.subr.mxu0 0.0
    %380 = vmatpush1.msra.mxu0 0.0
    %381 = vmatprep.subr.mxu0 0.0
    %382 = vmatpush1.msra.mxu0 0.0
    %383 = vmatprep.subr.mxu0 0.0
    %384 = vmatpush1.msra.mxu0 0.0
    %385 = vmatprep.subr.mxu0 0.0
    %386 = vmatpush1.msra.mxu0 0.0
    %387 = vmatprep.subr.mxu0 0.0
    %388 = vmatpush1.msra.mxu0 0.0
    %389 = vmatprep.subr.mxu0 0.0
    %390 = vmatpush1.msra.mxu0 0.0
    %391 = vmatprep.subr.mxu0 0.0
    %392 = vmatpush1.msra.mxu0 0.0
    %393 = vmatprep.subr.mxu0 0.0
    %394 = vmatpush1.msra.mxu0 0.0
    %395 = vmatprep.subr.mxu0 0.0
    %396 = vmatpush1.msra.mxu0 0.0
    %397 = vmatprep.subr.mxu0 0.0
    %398 = vmatpush1.msra.mxu0 0.0
    %399 = vmatprep.subr.mxu0 0.0
    %400 = vmatpush1.msra.mxu0 0.0
    %401 = vmatprep.subr.mxu0 0.0
    %402 = vmatpush1.msra.mxu0 0.0
    %403 = vmatprep.subr.mxu0 0.0
    %404 = vmatpush1.msra.mxu0 0.0
    %405 = vmatprep.subr.mxu0 0.0
    %406 = vmatpush1.msra.mxu0 0.0
    %407 = vmatprep.subr.mxu0 0.0
    %408 = vmatpush1.msra.mxu0 0.0
    %409 = vmatprep.subr.mxu0 0.0
    %410 = vmatpush1.msra.mxu0 0.0
    %411 = vmatprep.subr.mxu0 0.0
    %412 = vmatpush1.msra.mxu0 0.0
    %413 = vmatprep.subr.mxu0 0.0
    %414 = vmatpush1.msra.mxu0 0.0
    %415 = vmatprep.subr.mxu0 0.0
    %416 = vmatpush1.msra.mxu0 0.0
    %417 = vmatprep.subr.mxu0 0.0
    %418 = vmatpush1.msra.mxu0 0.0
    %419 = vmatprep.subr.mxu0 0.0
    %420 = vmatpush1.msra.mxu0 0.0
    %421 = vmatprep.subr.mxu0 0.0
    %422 = vmatpush1.msra.mxu0 0.0
    %423 = vmatprep.subr.mxu0 0.0
    %424 = vmatpush1.msra.mxu0 0.0
    %425 = vmatprep.subr.mxu0 0.0
    %426 = vmatpush1.msra.mxu0 0.0
    %427 = vmatprep.subr.mxu0 0.0
    %428 = vmatpush1.msra.mxu0 0.0
    %429 = vmatprep.subr.mxu0 0.0
    %430 = vmatpush1.msra.mxu0 0.0
    %431 = vmatprep.subr.mxu0 0.0
    %432 = vmatpush1.msra.mxu0 0.0
    %433 = vmatprep.subr.mxu0 0.0
    %434 = vmatpush1.msra.mxu0 0.0
    %435 = vmatprep.mubr.f32.mxu0 0.0
    %436 = vmatmul.mubr.f32.gmra.mrb[0].mxu0 %v369
    %v437 = vpop.f32.mrb[0].mxu0
    %v438 = vadd.f32 0.0, %v437
    %v439 = vpop.f32.mrb[0].mxu0
    %440 = vdwg.mxu0
    %v441 = vadd.f32 %v364, %v438
    %v442 = vadd.f32 %v441, %v285
    %443 = vset.pattern.permute.xlu0 2
    %444 = vperm.xlu0 %443, %v110
    %v445 = vpop.permute.xlu0 %444
    %v447 = vmul.f32 %v445, %v121
    %448 = vrot.lane.b32.xlu0 %v109, 120
    %v449 = vpop.permute.xlu0 %448
    %v450 = vsel %vm124, %v449, 0
    %452 = vmatprep.subr.mxu0 0.0
    %453 = vmatpush1.msra.mxu0 %v130
    %454 = vmatprep.subr.mxu0 0.0
    %455 = vmatpush1.msra.mxu0 0.0
    %456 = vmatprep.subr.mxu0 0.0
    %457 = vmatpush1.msra.mxu0 0.0
    %458 = vmatprep.subr.mxu0 0.0
    %459 = vmatpush1.msra.mxu0 0.0
    %460 = vmatprep.subr.mxu0 0.0
    %461 = vmatpush1.msra.mxu0 0.0
    %462 = vmatprep.subr.mxu0 0.0
    %463 = vmatpush1.msra.mxu0 0.0
    %464 = vmatprep.subr.mxu0 0.0
    %465 = vmatpush1.msra.mxu0 0.0
    %466 = vmatprep.subr.mxu0 0.0
    %467 = vmatpush1.msra.mxu0 0.0
    %468 = vmatprep.subr.mxu0 0.0
    %469 = vmatpush1.msra.mxu0 0.0
    %470 = vmatprep.subr.mxu0 0.0
    %471 = vmatpush1.msra.mxu0 0.0
    %472 = vmatprep.subr.mxu0 0.0
    %473 = vmatpush1.msra.mxu0 0.0
    %474 = vmatprep.subr.mxu0 0.0
    %475 = vmatpush1.msra.mxu0 0.0
    %476 = vmatprep.subr.mxu0 0.0
    %477 = vmatpush1.msra.mxu0 0.0
    %478 = vmatprep.subr.mxu0 0.0
    %479 = vmatpush1.msra.mxu0 0.0
    %480 = vmatprep.subr.mxu0 0.0
    %481 = vmatpush1.msra.mxu0 0.0
    %482 = vmatprep.subr.mxu0 0.0
    %483 = vmatpush1.msra.mxu0 0.0
    %484 = vmatprep.subr.mxu0 0.0
    %485 = vmatpush1.msra.mxu0 0.0
    %486 = vmatprep.subr.mxu0 0.0
    %487 = vmatpush1.msra.mxu0 0.0
    %488 = vmatprep.subr.mxu0 0.0
    %489 = vmatpush1.msra.mxu0 0.0
    %490 = vmatprep.subr.mxu0 0.0
    %491 = vmatpush1.msra.mxu0 0.0
    %492 = vmatprep.subr.mxu0 0.0
    %493 = vmatpush1.msra.mxu0 0.0
    %494 = vmatprep.subr.mxu0 0.0
    %495 = vmatpush1.msra.mxu0 0.0
    %496 = vmatprep.subr.mxu0 0.0
    %497 = vmatpush1.msra.mxu0 0.0
    %498 = vmatprep.subr.mxu0 0.0
    %499 = vmatpush1.msra.mxu0 0.0
    %500 = vmatprep.subr.mxu0 0.0
    %501 = vmatpush1.msra.mxu0 0.0
    %502 = vmatprep.subr.mxu0 0.0
    %503 = vmatpush1.msra.mxu0 0.0
    %504 = vmatprep.subr.mxu0 0.0
    %505 = vmatpush1.msra.mxu0 0.0
    %506 = vmatprep.subr.mxu0 0.0
    %507 = vmatpush1.msra.mxu0 0.0
    %508 = vmatprep.subr.mxu0 0.0
    %509 = vmatpush1.msra.mxu0 0.0
    %510 = vmatprep.subr.mxu0 0.0
    %511 = vmatpush1.msra.mxu0 0.0
    %512 = vmatprep.subr.mxu0 0.0
    %513 = vmatpush1.msra.mxu0 0.0
    %514 = vmatprep.subr.mxu0 0.0
    %515 = vmatpush1.msra.mxu0 0.0
    %516 = vmatprep.mubr.f32.mxu0 0.0
    %517 = vmatmul.mubr.f32.gmra.mrb[0].mxu0 %v450
    %v518 = vpop.f32.mrb[0].mxu0
    %v519 = vadd.f32 %v447, %v518
    %v520 = vpop.f32.mrb[0].mxu0
    %521 = vdwg.mxu0
    %522 = vrot.lane.b32.xlu0 %v111, 106
    %v523 = vpop.permute.xlu0 %522
    %v524 = vsel %vm202, %v523, 0
    %526 = vmatprep.subr.mxu0 0.0
    %527 = vmatpush1.msra.mxu0 %v95
    %528 = vmatprep.subr.mxu0 0.0
    %529 = vmatpush1.msra.mxu0 %v208
    %530 = vmatprep.subr.mxu0 0.0
    %531 = vmatpush1.msra.mxu0 0.0
    %532 = vmatprep.subr.mxu0 0.0
    %533 = vmatpush1.msra.mxu0 0.0
    %534 = vmatprep.subr.mxu0 0.0
    %535 = vmatpush1.msra.mxu0 0.0
    %536 = vmatprep.subr.mxu0 0.0
    %537 = vmatpush1.msra.mxu0 0.0
    %538 = vmatprep.subr.mxu0 0.0
    %539 = vmatpush1.msra.mxu0 0.0
    %540 = vmatprep.subr.mxu0 0.0
    %541 = vmatpush1.msra.mxu0 0.0
    %542 = vmatprep.subr.mxu0 0.0
    %543 = vmatpush1.msra.mxu0 0.0
    %544 = vmatprep.subr.mxu0 0.0
    %545 = vmatpush1.msra.mxu0 0.0
    %546 = vmatprep.subr.mxu0 0.0
    %547 = vmatpush1.msra.mxu0 0.0
    %548 = vmatprep.subr.mxu0 0.0
    %549 = vmatpush1.msra.mxu0 0.0
    %550 = vmatprep.subr.mxu0 0.0
    %551 = vmatpush1.msra.mxu0 0.0
    %552 = vmatprep.subr.mxu0 0.0
    %553 = vmatpush1.msra.mxu0 0.0
    %554 = vmatprep.subr.mxu0 0.0
    %555 = vmatpush1.msra.mxu0 0.0
    %556 = vmatprep.subr.mxu0 0.0
    %557 = vmatpush1.msra.mxu0 0.0
    %558 = vmatprep.subr.mxu0 0.0
    %559 = vmatpush1.msra.mxu0 0.0
    %560 = vmatprep.subr.mxu0 0.0
    %561 = vmatpush1.msra.mxu0 0.0
    %562 = vmatprep.subr.mxu0 0.0
    %563 = vmatpush1.msra.mxu0 0.0
    %564 = vmatprep.subr.mxu0 0.0
    %565 = vmatpush1.msra.mxu0 0.0
    %566 = vmatprep.subr.mxu0 0.0
    %567 = vmatpush1.msra.mxu0 0.0
    %568 = vmatprep.subr.mxu0 0.0
    %569 = vmatpush1.msra.mxu0 0.0
    %570 = vmatprep.subr.mxu0 0.0
    %571 = vmatpush1.msra.mxu0 0.0
    %572 = vmatprep.subr.mxu0 0.0
    %573 = vmatpush1.msra.mxu0 0.0
    %574 = vmatprep.subr.mxu0 0.0
    %575 = vmatpush1.msra.mxu0 0.0
    %576 = vmatprep.subr.mxu0 0.0
    %577 = vmatpush1.msra.mxu0 0.0
    %578 = vmatprep.subr.mxu0 0.0
    %579 = vmatpush1.msra.mxu0 0.0
    %580 = vmatprep.subr.mxu0 0.0
    %581 = vmatpush1.msra.mxu0 0.0
    %582 = vmatprep.subr.mxu0 0.0
    %583 = vmatpush1.msra.mxu0 0.0
    %584 = vmatprep.subr.mxu0 0.0
    %585 = vmatpush1.msra.mxu0 0.0
    %586 = vmatprep.subr.mxu0 0.0
    %587 = vmatpush1.msra.mxu0 0.0
    %588 = vmatprep.subr.mxu0 0.0
    %589 = vmatpush1.msra.mxu0 0.0
    %590 = vmatprep.mubr.f32.mxu0 0.0
    %591 = vmatmul.mubr.f32.gmra.mrb[0].mxu0 %v524
    %v592 = vpop.f32.mrb[0].mxu0
    %v593 = vadd.f32 0.0, %v592
    %v594 = vpop.f32.mrb[0].mxu0
    %595 = vdwg.mxu0
    %v596 = vadd.f32 %v519, %v593
    %v597 = vadd.f32 %v596, %v285
    %598 = vset.pattern.permute.xlu0 3
    %599 = vperm.xlu0 %598, %v110
    %v600 = vpop.permute.xlu0 %599
    %v602 = vmul.f32 %v600, %v121
    %603 = vrot.lane.b32.xlu0 %v109, 116
    %v604 = vpop.permute.xlu0 %603
    %v605 = vsel %vm124, %v604, 0
    %607 = vmatprep.subr.mxu0 0.0
    %608 = vmatpush1.msra.mxu0 %v130
    %609 = vmatprep.subr.mxu0 0.0
    %610 = vmatpush1.msra.mxu0 0.0
    %611 = vmatprep.subr.mxu0 0.0
    %612 = vmatpush1.msra.mxu0 0.0
    %613 = vmatprep.subr.mxu0 0.0
    %614 = vmatpush1.msra.mxu0 0.0
    %615 = vmatprep.subr.mxu0 0.0
    %616 = vmatpush1.msra.mxu0 0.0
    %617 = vmatprep.subr.mxu0 0.0
    %618 = vmatpush1.msra.mxu0 0.0
    %619 = vmatprep.subr.mxu0 0.0
    %620 = vmatpush1.msra.mxu0 0.0
    %621 = vmatprep.subr.mxu0 0.0
    %622 = vmatpush1.msra.mxu0 0.0
    %623 = vmatprep.subr.mxu0 0.0
    %624 = vmatpush1.msra.mxu0 0.0
    %625 = vmatprep.subr.mxu0 0.0
    %626 = vmatpush1.msra.mxu0 0.0
    %627 = vmatprep.subr.mxu0 0.0
    %628 = vmatpush1.msra.mxu0 0.0
    %629 = vmatprep.subr.mxu0 0.0
    %630 = vmatpush1.msra.mxu0 0.0
    %631 = vmatprep.subr.mxu0 0.0
    %632 = vmatpush1.msra.mxu0 0.0
    %633 = vmatprep.subr.mxu0 0.0
    %634 = vmatpush1.msra.mxu0 0.0
    %635 = vmatprep.subr.mxu0 0.0
    %636 = vmatpush1.msra.mxu0 0.0
    %637 = vmatprep.subr.mxu0 0.0
    %638 = vmatpush1.msra.mxu0 0.0
    %639 = vmatprep.subr.mxu0 0.0
    %640 = vmatpush1.msra.mxu0 0.0
    %641 = vmatprep.subr.mxu0 0.0
    %642 = vmatpush1.msra.mxu0 0.0
    %643 = vmatprep.subr.mxu0 0.0
    %644 = vmatpush1.msra.mxu0 0.0
    %645 = vmatprep.subr.mxu0 0.0
    %646 = vmatpush1.msra.mxu0 0.0
    %647 = vmatprep.subr.mxu0 0.0
    %648 = vmatpush1.msra.mxu0 0.0
    %649 = vmatprep.subr.mxu0 0.0
    %650 = vmatpush1.msra.mxu0 0.0
    %651 = vmatprep.subr.mxu0 0.0
    %652 = vmatpush1.msra.mxu0 0.0
    %653 = vmatprep.subr.mxu0 0.0
    %654 = vmatpush1.msra.mxu0 0.0
    %655 = vmatprep.subr.mxu0 0.0
    %656 = vmatpush1.msra.mxu0 0.0
    %657 = vmatprep.subr.mxu0 0.0
    %658 = vmatpush1.msra.mxu0 0.0
    %659 = vmatprep.subr.mxu0 0.0
    %660 = vmatpush1.msra.mxu0 0.0
    %661 = vmatprep.subr.mxu0 0.0
    %662 = vmatpush1.msra.mxu0 0.0
    %663 = vmatprep.subr.mxu0 0.0
    %664 = vmatpush1.msra.mxu0 0.0
    %665 = vmatprep.subr.mxu0 0.0
    %666 = vmatpush1.msra.mxu0 0.0
    %667 = vmatprep.subr.mxu0 0.0
    %668 = vmatpush1.msra.mxu0 0.0
    %669 = vmatprep.subr.mxu0 0.0
    %670 = vmatpush1.msra.mxu0 0.0
    %671 = vmatprep.mubr.f32.mxu0 0.0
    %672 = vmatmul.mubr.f32.gmra.mrb[0].mxu0 %v605
    %v673 = vpop.f32.mrb[0].mxu0
    %v674 = vadd.f32 %v602, %v673
    %v675 = vpop.f32.mrb[0].mxu0
    %676 = vdwg.mxu0
    %677 = vrot.lane.b32.xlu0 %v111, 95
    %v678 = vpop.permute.xlu0 %677
    %v679 = vsel %vm202, %v678, 0
    %681 = vmatprep.subr.mxu0 0.0
    %682 = vmatpush1.msra.mxu0 %v95
    %683 = vmatprep.subr.mxu0 0.0
    %684 = vmatpush1.msra.mxu0 %v208
    %685 = vmatprep.subr.mxu0 0.0
    %686 = vmatpush1.msra.mxu0 0.0
    %687 = vmatprep.subr.mxu0 0.0
    %688 = vmatpush1.msra.mxu0 0.0
    %689 = vmatprep.subr.mxu0 0.0
    %690 = vmatpush1.msra.mxu0 0.0
    %691 = vmatprep.subr.mxu0 0.0
    %692 = vmatpush1.msra.mxu0 0.0
    %693 = vmatprep.subr.mxu0 0.0
    %694 = vmatpush1.msra.mxu0 0.0
    %695 = vmatprep.subr.mxu0 0.0
    %696 = vmatpush1.msra.mxu0 0.0
    %697 = vmatprep.subr.mxu0 0.0
    %698 = vmatpush1.msra.mxu0 0.0
    %699 = vmatprep.subr.mxu0 0.0
    %700 = vmatpush1.msra.mxu0 0.0
    %701 = vmatprep.subr.mxu0 0.0
    %702 = vmatpush1.msra.mxu0 0.0
    %703 = vmatprep.subr.mxu0 0.0
    %704 = vmatpush1.msra.mxu0 0.0
    %705 = vmatprep.subr.mxu0 0.0
    %706 = vmatpush1.msra.mxu0 0.0
    %707 = vmatprep.subr.mxu0 0.0
    %708 = vmatpush1.msra.mxu0 0.0
    %709 = vmatprep.subr.mxu0 0.0
    %710 = vmatpush1.msra.mxu0 0.0
    %711 = vmatprep.subr.mxu0 0.0
    %712 = vmatpush1.msra.mxu0 0.0
    %713 = vmatprep.subr.mxu0 0.0
    %714 = vmatpush1.msra.mxu0 0.0
    %715 = vmatprep.subr.mxu0 0.0
    %716 = vmatpush1.msra.mxu0 0.0
    %717 = vmatprep.subr.mxu0 0.0
    %718 = vmatpush1.msra.mxu0 0.0
    %719 = vmatprep.subr.mxu0 0.0
    %720 = vmatpush1.msra.mxu0 0.0
    %721 = vmatprep.subr.mxu0 0.0
    %722 = vmatpush1.msra.mxu0 0.0
    %723 = vmatprep.subr.mxu0 0.0
    %724 = vmatpush1.msra.mxu0 0.0
    %725 = vmatprep.subr.mxu0 0.0
    %726 = vmatpush1.msra.mxu0 0.0
    %727 = vmatprep.subr.mxu0 0.0
    %728 = vmatpush1.msra.mxu0 0.0
    %729 = vmatprep.subr.mxu0 0.0
    %730 = vmatpush1.msra.mxu0 0.0
    %731 = vmatprep.subr.mxu0 0.0
    %732 = vmatpush1.msra.mxu0 0.0
    %733 = vmatprep.subr.mxu0 0.0
    %734 = vmatpush1.msra.mxu0 0.0
    %735 = vmatprep.subr.mxu0 0.0
    %736 = vmatpush1.msra.mxu0 0.0
    %737 = vmatprep.subr.mxu0 0.0
    %738 = vmatpush1.msra.mxu0 0.0
    %739 = vmatprep.subr.mxu0 0.0
    %740 = vmatpush1.msra.mxu0 0.0
    %741 = vmatprep.subr.mxu0 0.0
    %742 = vmatpush1.msra.mxu0 0.0
    %743 = vmatprep.subr.mxu0 0.0
    %744 = vmatpush1.msra.mxu0 0.0
    %745 = vmatprep.mubr.f32.mxu0 0.0
    %746 = vmatmul.mubr.f32.gmra.mrb[0].mxu0 %v679
    %v747 = vpop.f32.mrb[0].mxu0
    %v748 = vadd.f32 0.0, %v747
    %v749 = vpop.f32.mrb[0].mxu0
    %750 = vdwg.mxu0
    %v751 = vadd.f32 %v674, %v748
    %v752 = vadd.f32 %v751, %v285
    %753 = vset.pattern.permute.xlu0 4
    %754 = vperm.xlu0 %753, %v110
    %v755 = vpop.permute.xlu0 %754
    %v757 = vmul.f32 %v755, %v121
    %758 = vrot.lane.b32.xlu0 %v109, 112
    %v759 = vpop.permute.xlu0 %758
    %v760 = vsel %vm124, %v759, 0
    %762 = vmatprep.subr.mxu0 0.0
    %763 = vmatpush1.msra.mxu0 %v130
    %764 = vmatprep.subr.mxu0 0.0
    %765 = vmatpush1.msra.mxu0 0.0
    %766 = vmatprep.subr.mxu0 0.0
    %767 = vmatpush1.msra.mxu0 0.0
    %768 = vmatprep.subr.mxu0 0.0
    %769 = vmatpush1.msra.mxu0 0.0
    %770 = vmatprep.subr.mxu0 0.0
    %771 = vmatpush1.msra.mxu0 0.0
    %772 = vmatprep.subr.mxu0 0.0
    %773 = vmatpush1.msra.mxu0 0.0
    %774 = vmatprep.subr.mxu0 0.0
    %775 = vmatpush1.msra.mxu0 0.0
    %776 = vmatprep.subr.mxu0 0.0
    %777 = vmatpush1.msra.mxu0 0.0
    %778 = vmatprep.subr.mxu0 0.0
    %779 = vmatpush1.msra.mxu0 0.0
    %780 = vmatprep.subr.mxu0 0.0
    %781 = vmatpush1.msra.mxu0 0.0
    %782 = vmatprep.subr.mxu0 0.0
    %783 = vmatpush1.msra.mxu0 0.0
    %784 = vmatprep.subr.mxu0 0.0
    %785 = vmatpush1.msra.mxu0 0.0
    %786 = vmatprep.subr.mxu0 0.0
    %787 = vmatpush1.msra.mxu0 0.0
    %788 = vmatprep.subr.mxu0 0.0
    %789 = vmatpush1.msra.mxu0 0.0
    %790 = vmatprep.subr.mxu0 0.0
    %791 = vmatpush1.msra.mxu0 0.0
    %792 = vmatprep.subr.mxu0 0.0
    %793 = vmatpush1.msra.mxu0 0.0
    %794 = vmatprep.subr.mxu0 0.0
    %795 = vmatpush1.msra.mxu0 0.0
    %796 = vmatprep.subr.mxu0 0.0
    %797 = vmatpush1.msra.mxu0 0.0
    %798 = vmatprep.subr.mxu0 0.0
    %799 = vmatpush1.msra.mxu0 0.0
    %800 = vmatprep.subr.mxu0 0.0
    %801 = vmatpush1.msra.mxu0 0.0
    %802 = vmatprep.subr.mxu0 0.0
    %803 = vmatpush1.msra.mxu0 0.0
    %804 = vmatprep.subr.mxu0 0.0
    %805 = vmatpush1.msra.mxu0 0.0
    %806 = vmatprep.subr.mxu0 0.0
    %807 = vmatpush1.msra.mxu0 0.0
    %808 = vmatprep.subr.mxu0 0.0
    %809 = vmatpush1.msra.mxu0 0.0
    %810 = vmatprep.subr.mxu0 0.0
    %811 = vmatpush1.msra.mxu0 0.0
    %812 = vmatprep.subr.mxu0 0.0
    %813 = vmatpush1.msra.mxu0 0.0
    %814 = vmatprep.subr.mxu0 0.0
    %815 = vmatpush1.msra.mxu0 0.0
    %816 = vmatprep.subr.mxu0 0.0
    %817 = vmatpush1.msra.mxu0 0.0
    %818 = vmatprep.subr.mxu0 0.0
    %819 = vmatpush1.msra.mxu0 0.0
    %820 = vmatprep.subr.mxu0 0.0
    %821 = vmatpush1.msra.mxu0 0.0
    %822 = vmatprep.subr.mxu0 0.0
    %823 = vmatpush1.msra.mxu0 0.0
    %824 = vmatprep.subr.mxu0 0.0
    %825 = vmatpush1.msra.mxu0 0.0
    %826 = vmatprep.mubr.f32.mxu0 0.0
    %827 = vmatmul.mubr.f32.gmra.mrb[0].mxu0 %v760
    %v828 = vpop.f32.mrb[0].mxu0
    %v829 = vadd.f32 %v757, %v828
    %v830 = vpop.f32.mrb[0].mxu0
    %831 = vdwg.mxu0
    %832 = vrot.lane.b32.xlu0 %v111, 84
    %v833 = vpop.permute.xlu0 %832
    %v834 = vsel %vm202, %v833, 0
    %836 = vmatprep.subr.mxu0 0.0
    %837 = vmatpush1.msra.mxu0 %v95
    %838 = vmatprep.subr.mxu0 0.0
    %839 = vmatpush1.msra.mxu0 %v208
    %840 = vmatprep.subr.mxu0 0.0
    %841 = vmatpush1.msra.mxu0 0.0
    %842 = vmatprep.subr.mxu0 0.0
    %843 = vmatpush1.msra.mxu0 0.0
    %844 = vmatprep.subr.mxu0 0.0
    %845 = vmatpush1.msra.mxu0 0.0
    %846 = vmatprep.subr.mxu0 0.0
    %847 = vmatpush1.msra.mxu0 0.0
    %848 = vmatprep.subr.mxu0 0.0
    %849 = vmatpush1.msra.mxu0 0.0
    %850 = vmatprep.subr.mxu0 0.0
    %851 = vmatpush1.msra.mxu0 0.0
    %852 = vmatprep.subr.mxu0 0.0
    %853 = vmatpush1.msra.mxu0 0.0
    %854 = vmatprep.subr.mxu0 0.0
    %855 = vmatpush1.msra.mxu0 0.0
    %856 = vmatprep.subr.mxu0 0.0
    %857 = vmatpush1.msra.mxu0 0.0
    %858 = vmatprep.subr.mxu0 0.0
    %859 = vmatpush1.msra.mxu0 0.0
    %860 = vmatprep.subr.mxu0 0.0
    %861 = vmatpush1.msra.mxu0 0.0
    %862 = vmatprep.subr.mxu0 0.0
    %863 = vmatpush1.msra.mxu0 0.0
    %864 = vmatprep.subr.mxu0 0.0
    %865 = vmatpush1.msra.mxu0 0.0
    %866 = vmatprep.subr.mxu0 0.0
    %867 = vmatpush1.msra.mxu0 0.0
    %868 = vmatprep.subr.mxu0 0.0
    %869 = vmatpush1.msra.mxu0 0.0
    %870 = vmatprep.subr.mxu0 0.0
    %871 = vmatpush1.msra.mxu0 0.0
    %872 = vmatprep.subr.mxu0 0.0
    %873 = vmatpush1.msra.mxu0 0.0
    %874 = vmatprep.subr.mxu0 0.0
    %875 = vmatpush1.msra.mxu0 0.0
    %876 = vmatprep.subr.mxu0 0.0
    %877 = vmatpush1.msra.mxu0 0.0
    %878 = vmatprep.subr.mxu0 0.0
    %879 = vmatpush1.msra.mxu0 0.0
    %880 = vmatprep.subr.mxu0 0.0
    %881 = vmatpush1.msra.mxu0 0.0
    %882 = vmatprep.subr.mxu0 0.0
    %883 = vmatpush1.msra.mxu0 0.0
    %884 = vmatprep.subr.mxu0 0.0
    %885 = vmatpush1.msra.mxu0 0.0
    %886 = vmatprep.subr.mxu0 0.0
    %887 = vmatpush1.msra.mxu0 0.0
    %888 = vmatprep.subr.mxu0 0.0
    %889 = vmatpush1.msra.mxu0 0.0
    %890 = vmatprep.subr.mxu0 0.0
    %891 = vmatpush1.msra.mxu0 0.0
    %892 = vmatprep.subr.mxu0 0.0
    %893 = vmatpush1.msra.mxu0 0.0
    %894 = vmatprep.subr.mxu0 0.0
    %895 = vmatpush1.msra.mxu0 0.0
    %896 = vmatprep.subr.mxu0 0.0
    %897 = vmatpush1.msra.mxu0 0.0
    %898 = vmatprep.subr.mxu0 0.0
    %899 = vmatpush1.msra.mxu0 0.0
    %900 = vmatprep.mubr.f32.mxu0 0.0
    %901 = vmatmul.mubr.f32.gmra.mrb[0].mxu0 %v834
    %v902 = vpop.f32.mrb[0].mxu0
    %v903 = vadd.f32 0.0, %v902
    %v904 = vpop.f32.mrb[0].mxu0
    %905 = vdwg.mxu0
    %v906 = vadd.f32 %v829, %v903
    %v907 = vadd.f32 %v906, %v285
    %908 = vset.pattern.permute.xlu0 5
    %909 = vperm.xlu0 %908, %v110
    %v910 = vpop.permute.xlu0 %909
    %v912 = vmul.f32 %v910, %v121
    %913 = vrot.lane.b32.xlu0 %v109, 108
    %v914 = vpop.permute.xlu0 %913
    %v915 = vsel %vm124, %v914, 0
    %917 = vmatprep.subr.mxu0 0.0
    %918 = vmatpush1.msra.mxu0 %v130
    %919 = vmatprep.subr.mxu0 0.0
    %920 = vmatpush1.msra.mxu0 0.0
    %921 = vmatprep.subr.mxu0 0.0
    %922 = vmatpush1.msra.mxu0 0.0
    %923 = vmatprep.subr.mxu0 0.0
    %924 = vmatpush1.msra.mxu0 0.0
    %925 = vmatprep.subr.mxu0 0.0
    %926 = vmatpush1.msra.mxu0 0.0
    %927 = vmatprep.subr.mxu0 0.0
    %928 = vmatpush1.msra.mxu0 0.0
    %929 = vmatprep.subr.mxu0 0.0
    %930 = vmatpush1.msra.mxu0 0.0
    %931 = vmatprep.subr.mxu0 0.0
    %932 = vmatpush1.msra.mxu0 0.0
    %933 = vmatprep.subr.mxu0 0.0
    %934 = vmatpush1.msra.mxu0 0.0
    %935 = vmatprep.subr.mxu0 0.0
    %936 = vmatpush1.msra.mxu0 0.0
    %937 = vmatprep.subr.mxu0 0.0
    %938 = vmatpush1.msra.mxu0 0.0
    %939 = vmatprep.subr.mxu0 0.0
    %940 = vmatpush1.msra.mxu0 0.0
    %941 = vmatprep.subr.mxu0 0.0
    %942 = vmatpush1.msra.mxu0 0.0
    %943 = vmatprep.subr.mxu0 0.0
    %944 = vmatpush1.msra.mxu0 0.0
    %945 = vmatprep.subr.mxu0 0.0
    %946 = vmatpush1.msra.mxu0 0.0
    %947 = vmatprep.subr.mxu0 0.0
    %948 = vmatpush1.msra.mxu0 0.0
    %949 = vmatprep.subr.mxu0 0.0
    %950 = vmatpush1.msra.mxu0 0.0
    %951 = vmatprep.subr.mxu0 0.0
    %952 = vmatpush1.msra.mxu0 0.0
    %953 = vmatprep.subr.mxu0 0.0
    %954 = vmatpush1.msra.mxu0 0.0
    %955 = vmatprep.subr.mxu0 0.0
    %956 = vmatpush1.msra.mxu0 0.0
    %957 = vmatprep.subr.mxu0 0.0
    %958 = vmatpush1.msra.mxu0 0.0
    %959 = vmatprep.subr.mxu0 0.0
    %960 = vmatpush1.msra.mxu0 0.0
    %961 = vmatprep.subr.mxu0 0.0
    %962 = vmatpush1.msra.mxu0 0.0
    %963 = vmatprep.subr.mxu0 0.0
    %964 = vmatpush1.msra.mxu0 0.0
    %965 = vmatprep.subr.mxu0 0.0
    %966 = vmatpush1.msra.mxu0 0.0
    %967 = vmatprep.subr.mxu0 0.0
    %968 = vmatpush1.msra.mxu0 0.0
    %969 = vmatprep.subr.mxu0 0.0
    %970 = vmatpush1.msra.mxu0 0.0
    %971 = vmatprep.subr.mxu0 0.0
    %972 = vmatpush1.msra.mxu0 0.0
    %973 = vmatprep.subr.mxu0 0.0
    %974 = vmatpush1.msra.mxu0 0.0
    %975 = vmatprep.subr.mxu0 0.0
    %976 = vmatpush1.msra.mxu0 0.0
    %977 = vmatprep.subr.mxu0 0.0
    %978 = vmatpush1.msra.mxu0 0.0
    %979 = vmatprep.subr.mxu0 0.0
    %980 = vmatpush1.msra.mxu0 0.0
    %981 = vmatprep.mubr.f32.mxu0 0.0
    %982 = vmatmul.mubr.f32.gmra.mrb[0].mxu0 %v915
    %v983 = vpop.f32.mrb[0].mxu0
    %v984 = vadd.f32 %v912, %v983
    %v985 = vpop.f32.mrb[0].mxu0
    %986 = vdwg.mxu0
    %987 = vrot.lane.b32.xlu0 %v111, 73
    %v988 = vpop.permute.xlu0 %987
    %v989 = vsel %vm202, %v988, 0
    %991 = vmatprep.subr.mxu0 0.0
    %992 = vmatpush1.msra.mxu0 %v95
    %993 = vmatprep.subr.mxu0 0.0
    %994 = vmatpush1.msra.mxu0 %v208
    %995 = vmatprep.subr.mxu0 0.0
    %996 = vmatpush1.msra.mxu0 0.0
    %997 = vmatprep.subr.mxu0 0.0
    %998 = vmatpush1.msra.mxu0 0.0
    %999 = vmatprep.subr.mxu0 0.0
    %1000 = vmatpush1.msra.mxu0 0.0
    %1001 = vmatprep.subr.mxu0 0.0
    %1002 = vmatpush1.msra.mxu0 0.0
    %1003 = vmatprep.subr.mxu0 0.0
    %1004 = vmatpush1.msra.mxu0 0.0
    %1005 = vmatprep.subr.mxu0 0.0
    %1006 = vmatpush1.msra.mxu0 0.0
    %1007 = vmatprep.subr.mxu0 0.0
    %1008 = vmatpush1.msra.mxu0 0.0
    %1009 = vmatprep.subr.mxu0 0.0
    %1010 = vmatpush1.msra.mxu0 0.0
    %1011 = vmatprep.subr.mxu0 0.0
    %1012 = vmatpush1.msra.mxu0 0.0
    %1013 = vmatprep.subr.mxu0 0.0
    %1014 = vmatpush1.msra.mxu0 0.0
    %1015 = vmatprep.subr.mxu0 0.0
    %1016 = vmatpush1.msra.mxu0 0.0
    %1017 = vmatprep.subr.mxu0 0.0
    %1018 = vmatpush1.msra.mxu0 0.0
    %1019 = vmatprep.subr.mxu0 0.0
    %1020 = vmatpush1.msra.mxu0 0.0
    %1021 = vmatprep.subr.mxu0 0.0
    %1022 = vmatpush1.msra.mxu0 0.0
    %1023 = vmatprep.subr.mxu0 0.0
    %1024 = vmatpush1.msra.mxu0 0.0
    %1025 = vmatprep.subr.mxu0 0.0
    %1026 = vmatpush1.msra.mxu0 0.0
    %1027 = vmatprep.subr.mxu0 0.0
    %1028 = vmatpush1.msra.mxu0 0.0
    %1029 = vmatprep.subr.mxu0 0.0
    %1030 = vmatpush1.msra.mxu0 0.0
    %1031 = vmatprep.subr.mxu0 0.0
    %1032 = vmatpush1.msra.mxu0 0.0
    %1033 = vmatprep.subr.mxu0 0.0
    %1034 = vmatpush1.msra.mxu0 0.0
    %1035 = vmatprep.subr.mxu0 0.0
    %1036 = vmatpush1.msra.mxu0 0.0
    %1037 = vmatprep.subr.mxu0 0.0
    %1038 = vmatpush1.msra.mxu0 0.0
    %1039 = vmatprep.subr.mxu0 0.0
    %1040 = vmatpush1.msra.mxu0 0.0
    %1041 = vmatprep.subr.mxu0 0.0
    %1042 = vmatpush1.msra.mxu0 0.0
    %1043 = vmatprep.subr.mxu0 0.0
    %1044 = vmatpush1.msra.mxu0 0.0
    %1045 = vmatprep.subr.mxu0 0.0
    %1046 = vmatpush1.msra.mxu0 0.0
    %1047 = vmatprep.subr.mxu0 0.0
    %1048 = vmatpush1.msra.mxu0 0.0
    %1049 = vmatprep.subr.mxu0 0.0
    %1050 = vmatpush1.msra.mxu0 0.0
    %1051 = vmatprep.subr.mxu0 0.0
    %1052 = vmatpush1.msra.mxu0 0.0
    %1053 = vmatprep.subr.mxu0 0.0
    %1054 = vmatpush1.msra.mxu0 0.0
    %1055 = vmatprep.mubr.f32.mxu0 0.0
    %1056 = vmatmul.mubr.f32.gmra.mrb[0].mxu0 %v989
    %v1057 = vpop.f32.mrb[0].mxu0
    %v1058 = vadd.f32 0.0, %v1057
    %v1059 = vpop.f32.mrb[0].mxu0
    %1060 = vdwg.mxu0
    %v1061 = vadd.f32 %v984, %v1058
    %v1062 = vadd.f32 %v1061, %v285
    %1063 = vset.pattern.permute.xlu0 6
    %1064 = vperm.xlu0 %1063, %v110
    %v1065 = vpop.permute.xlu0 %1064
    %v1067 = vmul.f32 %v1065, %v121
    %1068 = vrot.lane.b32.xlu0 %v109, 104
    %v1069 = vpop.permute.xlu0 %1068
    %v1070 = vsel %vm124, %v1069, 0
    %1072 = vmatprep.subr.mxu0 0.0
    %1073 = vmatpush1.msra.mxu0 %v130
    %1074 = vmatprep.subr.mxu0 0.0
    %1075 = vmatpush1.msra.mxu0 0.0
    %1076 = vmatprep.subr.mxu0 0.0
    %1077 = vmatpush1.msra.mxu0 0.0
    %1078 = vmatprep.subr.mxu0 0.0
    %1079 = vmatpush1.msra.mxu0 0.0
    %1080 = vmatprep.subr.mxu0 0.0
    %1081 = vmatpush1.msra.mxu0 0.0
    %1082 = vmatprep.subr.mxu0 0.0
    %1083 = vmatpush1.msra.mxu0 0.0
    %1084 = vmatprep.subr.mxu0 0.0
    %1085 = vmatpush1.msra.mxu0 0.0
    %1086 = vmatprep.subr.mxu0 0.0
    %1087 = vmatpush1.msra.mxu0 0.0
    %1088 = vmatprep.subr.mxu0 0.0
    %1089 = vmatpush1.msra.mxu0 0.0
    %1090 = vmatprep.subr.mxu0 0.0
    %1091 = vmatpush1.msra.mxu0 0.0
    %1092 = vmatprep.subr.mxu0 0.0
    %1093 = vmatpush1.msra.mxu0 0.0
    %1094 = vmatprep.subr.mxu0 0.0
    %1095 = vmatpush1.msra.mxu0 0.0
    %1096 = vmatprep.subr.mxu0 0.0
    %1097 = vmatpush1.msra.mxu0 0.0
    %1098 = vmatprep.subr.mxu0 0.0
    %1099 = vmatpush1.msra.mxu0 0.0
    %1100 = vmatprep.subr.mxu0 0.0
    %1101 = vmatpush1.msra.mxu0 0.0
    %1102 = vmatprep.subr.mxu0 0.0
    %1103 = vmatpush1.msra.mxu0 0.0
    %1104 = vmatprep.subr.mxu0 0.0
    %1105 = vmatpush1.msra.mxu0 0.0
    %1106 = vmatprep.subr.mxu0 0.0
    %1107 = vmatpush1.msra.mxu0 0.0
    %1108 = vmatprep.subr.mxu0 0.0
    %1109 = vmatpush1.msra.mxu0 0.0
    %1110 = vmatprep.subr.mxu0 0.0
    %1111 = vmatpush1.msra.mxu0 0.0
    %1112 = vmatprep.subr.mxu0 0.0
    %1113 = vmatpush1.msra.mxu0 0.0
    %1114 = vmatprep.subr.mxu0 0.0
    %1115 = vmatpush1.msra.mxu0 0.0
    %1116 = vmatprep.subr.mxu0 0.0
    %1117 = vmatpush1.msra.mxu0 0.0
    %1118 = vmatprep.subr.mxu0 0.0
    %1119 = vmatpush1.msra.mxu0 0.0
    %1120 = vmatprep.subr.mxu0 0.0
    %1121 = vmatpush1.msra.mxu0 0.0
    %1122 = vmatprep.subr.mxu0 0.0
    %1123 = vmatpush1.msra.mxu0 0.0
    %1124 = vmatprep.subr.mxu0 0.0
    %1125 = vmatpush1.msra.mxu0 0.0
    %1126 = vmatprep.subr.mxu0 0.0
    %1127 = vmatpush1.msra.mxu0 0.0
    %1128 = vmatprep.subr.mxu0 0.0
    %1129 = vmatpush1.msra.mxu0 0.0
    %1130 = vmatprep.subr.mxu0 0.0
    %1131 = vmatpush1.msra.mxu0 0.0
    %1132 = vmatprep.subr.mxu0 0.0
    %1133 = vmatpush1.msra.mxu0 0.0
    %1134 = vmatprep.subr.mxu0 0.0
    %1135 = vmatpush1.msra.mxu0 0.0
    %1136 = vmatprep.mubr.f32.mxu0 0.0
    %1137 = vmatmul.mubr.f32.gmra.mrb[0].mxu0 %v1070
    %v1138 = vpop.f32.mrb[0].mxu0
    %v1139 = vadd.f32 %v1067, %v1138
    %v1140 = vpop.f32.mrb[0].mxu0
    %1141 = vdwg.mxu0
    %1142 = vrot.lane.b32.xlu0 %v111, 62
    %v1143 = vpop.permute.xlu0 %1142
    %v1144 = vsel %vm202, %v1143, 0
    %1146 = vmatprep.subr.mxu0 0.0
    %1147 = vmatpush1.msra.mxu0 %v95
    %1148 = vmatprep.subr.mxu0 0.0
    %1149 = vmatpush1.msra.mxu0 %v208
    %1150 = vmatprep.subr.mxu0 0.0
    %1151 = vmatpush1.msra.mxu0 0.0
    %1152 = vmatprep.subr.mxu0 0.0
    %1153 = vmatpush1.msra.mxu0 0.0
    %1154 = vmatprep.subr.mxu0 0.0
    %1155 = vmatpush1.msra.mxu0 0.0
    %1156 = vmatprep.subr.mxu0 0.0
    %1157 = vmatpush1.msra.mxu0 0.0
    %1158 = vmatprep.subr.mxu0 0.0
    %1159 = vmatpush1.msra.mxu0 0.0
    %1160 = vmatprep.subr.mxu0 0.0
    %1161 = vmatpush1.msra.mxu0 0.0
    %1162 = vmatprep.subr.mxu0 0.0
    %1163 = vmatpush1.msra.mxu0 0.0
    %1164 = vmatprep.subr.mxu0 0.0
    %1165 = vmatpush1.msra.mxu0 0.0
    %1166 = vmatprep.subr.mxu0 0.0
    %1167 = vmatpush1.msra.mxu0 0.0
    %1168 = vmatprep.subr.mxu0 0.0
    %1169 = vmatpush1.msra.mxu0 0.0
    %1170 = vmatprep.subr.mxu0 0.0
    %1171 = vmatpush1.msra.mxu0 0.0
    %1172 = vmatprep.subr.mxu0 0.0
    %1173 = vmatpush1.msra.mxu0 0.0
    %1174 = vmatprep.subr.mxu0 0.0
    %1175 = vmatpush1.msra.mxu0 0.0
    %1176 = vmatprep.subr.mxu0 0.0
    %1177 = vmatpush1.msra.mxu0 0.0
    %1178 = vmatprep.subr.mxu0 0.0
    %1179 = vmatpush1.msra.mxu0 0.0
    %1180 = vmatprep.subr.mxu0 0.0
    %1181 = vmatpush1.msra.mxu0 0.0
    %1182 = vmatprep.subr.mxu0 0.0
    %1183 = vmatpush1.msra.mxu0 0.0
    %1184 = vmatprep.subr.mxu0 0.0
    %1185 = vmatpush1.msra.mxu0 0.0
    %1186 = vmatprep.subr.mxu0 0.0
    %1187 = vmatpush1.msra.mxu0 0.0
    %1188 = vmatprep.subr.mxu0 0.0
    %1189 = vmatpush1.msra.mxu0 0.0
    %1190 = vmatprep.subr.mxu0 0.0
    %1191 = vmatpush1.msra.mxu0 0.0
    %1192 = vmatprep.subr.mxu0 0.0
    %1193 = vmatpush1.msra.mxu0 0.0
    %1194 = vmatprep.subr.mxu0 0.0
    %1195 = vmatpush1.msra.mxu0 0.0
    %1196 = vmatprep.subr.mxu0 0.0
    %1197 = vmatpush1.msra.mxu0 0.0
    %1198 = vmatprep.subr.mxu0 0.0
    %1199 = vmatpush1.msra.mxu0 0.0
    %1200 = vmatprep.subr.mxu0 0.0
    %1201 = vmatpush1.msra.mxu0 0.0
    %1202 = vmatprep.subr.mxu0 0.0
    %1203 = vmatpush1.msra.mxu0 0.0
    %1204 = vmatprep.subr.mxu0 0.0
    %1205 = vmatpush1.msra.mxu0 0.0
    %1206 = vmatprep.subr.mxu0 0.0
    %1207 = vmatpush1.msra.mxu0 0.0
    %1208 = vmatprep.subr.mxu0 0.0
    %1209 = vmatpush1.msra.mxu0 0.0
    %1210 = vmatprep.mubr.f32.mxu0 0.0
    %1211 = vmatmul.mubr.f32.gmra.mrb[0].mxu0 %v1144
    %v1212 = vpop.f32.mrb[0].mxu0
    %v1213 = vadd.f32 0.0, %v1212
    %v1214 = vpop.f32.mrb[0].mxu0
    %1215 = vdwg.mxu0
    %v1216 = vadd.f32 %v1139, %v1213
    %v1217 = vadd.f32 %v1216, %v285
    %1218 = vset.pattern.permute.xlu0 7
    %1219 = vperm.xlu0 %1218, %v110
    %v1220 = vpop.permute.xlu0 %1219
    %v1222 = vmul.f32 %v1220, %v121
    %1223 = vrot.lane.b32.xlu0 %v109, 100
    %v1224 = vpop.permute.xlu0 %1223
    %v1225 = vsel %vm124, %v1224, 0
    %1227 = vmatprep.subr.mxu0 0.0
    %1228 = vmatpush1.msra.mxu0 %v130
    %1229 = vmatprep.subr.mxu0 0.0
    %1230 = vmatpush1.msra.mxu0 0.0
    %1231 = vmatprep.subr.mxu0 0.0
    %1232 = vmatpush1.msra.mxu0 0.0
    %1233 = vmatprep.subr.mxu0 0.0
    %1234 = vmatpush1.msra.mxu0 0.0
    %1235 = vmatprep.subr.mxu0 0.0
    %1236 = vmatpush1.msra.mxu0 0.0
    %1237 = vmatprep.subr.mxu0 0.0
    %1238 = vmatpush1.msra.mxu0 0.0
    %1239 = vmatprep.subr.mxu0 0.0
    %1240 = vmatpush1.msra.mxu0 0.0
    %1241 = vmatprep.subr.mxu0 0.0
    %1242 = vmatpush1.msra.mxu0 0.0
    %1243 = vmatprep.subr.mxu0 0.0
    %1244 = vmatpush1.msra.mxu0 0.0
    %1245 = vmatprep.subr.mxu0 0.0
    %1246 = vmatpush1.msra.mxu0 0.0
    %1247 = vmatprep.subr.mxu0 0.0
    %1248 = vmatpush1.msra.mxu0 0.0
    %1249 = vmatprep.subr.mxu0 0.0
    %1250 = vmatpush1.msra.mxu0 0.0
    %1251 = vmatprep.subr.mxu0 0.0
    %1252 = vmatpush1.msra.mxu0 0.0
    %1253 = vmatprep.subr.mxu0 0.0
    %1254 = vmatpush1.msra.mxu0 0.0
    %1255 = vmatprep.subr.mxu0 0.0
    %1256 = vmatpush1.msra.mxu0 0.0
    %1257 = vmatprep.subr.mxu0 0.0
    %1258 = vmatpush1.msra.mxu0 0.0
    %1259 = vmatprep.subr.mxu0 0.0
    %1260 = vmatpush1.msra.mxu0 0.0
    %1261 = vmatprep.subr.mxu0 0.0
    %1262 = vmatpush1.msra.mxu0 0.0
    %1263 = vmatprep.subr.mxu0 0.0
    %1264 = vmatpush1.msra.mxu0 0.0
    %1265 = vmatprep.subr.mxu0 0.0
    %1266 = vmatpush1.msra.mxu0 0.0
    %1267 = vmatprep.subr.mxu0 0.0
    %1268 = vmatpush1.msra.mxu0 0.0
    %1269 = vmatprep.subr.mxu0 0.0
    %1270 = vmatpush1.msra.mxu0 0.0
    %1271 = vmatprep.subr.mxu0 0.0
    %1272 = vmatpush1.msra.mxu0 0.0
    %1273 = vmatprep.subr.mxu0 0.0
    %1274 = vmatpush1.msra.mxu0 0.0
    %1275 = vmatprep.subr.mxu0 0.0
    %1276 = vmatpush1.msra.mxu0 0.0
    %1277 = vmatprep.subr.mxu0 0.0
    %1278 = vmatpush1.msra.mxu0 0.0
    %1279 = vmatprep.subr.mxu0 0.0
    %1280 = vmatpush1.msra.mxu0 0.0
    %1281 = vmatprep.subr.mxu0 0.0
    %1282 = vmatpush1.msra.mxu0 0.0
    %1283 = vmatprep.subr.mxu0 0.0
    %1284 = vmatpush1.msra.mxu0 0.0
    %1285 = vmatprep.subr.mxu0 0.0
    %1286 = vmatpush1.msra.mxu0 0.0
    %1287 = vmatprep.subr.mxu0 0.0
    %1288 = vmatpush1.msra.mxu0 0.0
    %1289 = vmatprep.subr.mxu0 0.0
    %1290 = vmatpush1.msra.mxu0 0.0
    %1291 = vmatprep.mubr.f32.mxu0 0.0
    %1292 = vmatmul.mubr.f32.gmra.mrb[0].mxu0 %v1225
    %v1293 = vpop.f32.mrb[0].mxu0
    %v1294 = vadd.f32 %v1222, %v1293
    %v1295 = vpop.f32.mrb[0].mxu0
    %1296 = vdwg.mxu0
    %1297 = vrot.lane.b32.xlu0 %v111, 51
    %v1298 = vpop.permute.xlu0 %1297
    %v1299 = vsel %vm202, %v1298, 0
    %1301 = vmatprep.subr.mxu0 0.0
    %1302 = vmatpush1.msra.mxu0 %v95
    %1303 = vmatprep.subr.mxu0 0.0
    %1304 = vmatpush1.msra.mxu0 %v208
    %1305 = vmatprep.subr.mxu0 0.0
    %1306 = vmatpush1.msra.mxu0 0.0
    %1307 = vmatprep.subr.mxu0 0.0
    %1308 = vmatpush1.msra.mxu0 0.0
    %1309 = vmatprep.subr.mxu0 0.0
    %1310 = vmatpush1.msra.mxu0 0.0
    %1311 = vmatprep.subr.mxu0 0.0
    %1312 = vmatpush1.msra.mxu0 0.0
    %1313 = vmatprep.subr.mxu0 0.0
    %1314 = vmatpush1.msra.mxu0 0.0
    %1315 = vmatprep.subr.mxu0 0.0
    %1316 = vmatpush1.msra.mxu0 0.0
    %1317 = vmatprep.subr.mxu0 0.0
    %1318 = vmatpush1.msra.mxu0 0.0
    %1319 = vmatprep.subr.mxu0 0.0
    %1320 = vmatpush1.msra.mxu0 0.0
    %1321 = vmatprep.subr.mxu0 0.0
    %1322 = vmatpush1.msra.mxu0 0.0
    %1323 = vmatprep.subr.mxu0 0.0
    %1324 = vmatpush1.msra.mxu0 0.0
    %1325 = vmatprep.subr.mxu0 0.0
    %1326 = vmatpush1.msra.mxu0 0.0
    %1327 = vmatprep.subr.mxu0 0.0
    %1328 = vmatpush1.msra.mxu0 0.0
    %1329 = vmatprep.subr.mxu0 0.0
    %1330 = vmatpush1.msra.mxu0 0.0
    %1331 = vmatprep.subr.mxu0 0.0
    %1332 = vmatpush1.msra.mxu0 0.0
    %1333 = vmatprep.subr.mxu0 0.0
    %1334 = vmatpush1.msra.mxu0 0.0
    %1335 = vmatprep.subr.mxu0 0.0
    %1336 = vmatpush1.msra.mxu0 0.0
    %1337 = vmatprep.subr.mxu0 0.0
    %1338 = vmatpush1.msra.mxu0 0.0
    %1339 = vmatprep.subr.mxu0 0.0
    %1340 = vmatpush1.msra.mxu0 0.0
    %1341 = vmatprep.subr.mxu0 0.0
    %1342 = vmatpush1.msra.mxu0 0.0
    %1343 = vmatprep.subr.mxu0 0.0
    %1344 = vmatpush1.msra.mxu0 0.0
    %1345 = vmatprep.subr.mxu0 0.0
    %1346 = vmatpush1.msra.mxu0 0.0
    %1347 = vmatprep.subr.mxu0 0.0
    %1348 = vmatpush1.msra.mxu0 0.0
    %1349 = vmatprep.subr.mxu0 0.0
    %1350 = vmatpush1.msra.mxu0 0.0
    %1351 = vmatprep.subr.mxu0 0.0
    %1352 = vmatpush1.msra.mxu0 0.0
    %1353 = vmatprep.subr.mxu0 0.0
    %1354 = vmatpush1.msra.mxu0 0.0
    %1355 = vmatprep.subr.mxu0 0.0
    %1356 = vmatpush1.msra.mxu0 0.0
    %1357 = vmatprep.subr.mxu0 0.0
    %1358 = vmatpush1.msra.mxu0 0.0
    %1359 = vmatprep.subr.mxu0 0.0
    %1360 = vmatpush1.msra.mxu0 0.0
    %1361 = vmatprep.subr.mxu0 0.0
    %1362 = vmatpush1.msra.mxu0 0.0
    %1363 = vmatprep.subr.mxu0 0.0
    %1364 = vmatpush1.msra.mxu0 0.0
    %1365 = vmatprep.mubr.f32.mxu0 0.0
    %1366 = vmatmul.mubr.f32.gmra.mrb[0].mxu0 %v1299
    %v1367 = vpop.f32.mrb[0].mxu0
    %v1368 = vadd.f32 0.0, %v1367
    %v1369 = vpop.f32.mrb[0].mxu0
    %1370 = vdwg.mxu0
    %v1371 = vadd.f32 %v1294, %v1368
    %v1372 = vadd.f32 %v1371, %v285
    %vm1373 = vcmask 261120
    %v1375 = vsel %vm1373, 0.0, 0
    %1377 = vmatprep.subr.mxu0 0.0
    %1378 = vmatpush1.msra.mxu0 %v97
    %1379 = vmatprep.subr.mxu0 0.0
    %1380 = vmatpush1.msra.mxu0 %v98
    %1381 = vmatprep.subr.mxu0 0.0
    %1382 = vmatpush1.msra.mxu0 %v99
    %1383 = vmatprep.subr.mxu0 0.0
    %1384 = vmatpush1.msra.mxu0 %v100
    %1385 = vmatprep.subr.mxu0 0.0
    %1386 = vmatpush1.msra.mxu0 0.0
    %1387 = vmatprep.subr.mxu0 0.0
    %1388 = vmatpush1.msra.mxu0 0.0
    %1389 = vmatprep.subr.mxu0 0.0
    %1390 = vmatpush1.msra.mxu0 0.0
    %1391 = vmatprep.subr.mxu0 0.0
    %1392 = vmatpush1.msra.mxu0 0.0
    %1393 = vmatprep.subr.mxu0 0.0
    %1394 = vmatpush1.msra.mxu0 0.0
    %1395 = vmatprep.subr.mxu0 0.0
    %1396 = vmatpush1.msra.mxu0 0.0
    %1397 = vmatprep.subr.mxu0 0.0
    %1398 = vmatpush1.msra.mxu0 0.0
    %1399 = vmatprep.subr.mxu0 0.0
    %1400 = vmatpush1.msra.mxu0 0.0
    %1401 = vmatprep.subr.mxu0 0.0
    %1402 = vmatpush1.msra.mxu0 0.0
    %1403 = vmatprep.subr.mxu0 0.0
    %1404 = vmatpush1.msra.mxu0 0.0
    %1405 = vmatprep.subr.mxu0 0.0
    %1406 = vmatpush1.msra.mxu0 0.0
    %1407 = vmatprep.subr.mxu0 0.0
    %1408 = vmatpush1.msra.mxu0 0.0
    %1409 = vmatprep.subr.mxu0 0.0
    %1410 = vmatpush1.msra.mxu0 0.0
    %1411 = vmatprep.subr.mxu0 0.0
    %1412 = vmatpush1.msra.mxu0 0.0
    %1413 = vmatprep.subr.mxu0 0.0
    %1414 = vmatpush1.msra.mxu0 0.0
    %1415 = vmatprep.subr.mxu0 0.0
    %1416 = vmatpush1.msra.mxu0 0.0
    %1417 = vmatprep.subr.mxu0 0.0
    %1418 = vmatpush1.msra.mxu0 0.0
    %1419 = vmatprep.subr.mxu0 0.0
    %1420 = vmatpush1.msra.mxu0 0.0
    %1421 = vmatprep.subr.mxu0 0.0
    %1422 = vmatpush1.msra.mxu0 0.0
    %1423 = vmatprep.subr.mxu0 0.0
    %1424 = vmatpush1.msra.mxu0 0.0
    %1425 = vmatprep.subr.mxu0 0.0
    %1426 = vmatpush1.msra.mxu0 0.0
    %1427 = vmatprep.subr.mxu0 0.0
    %1428 = vmatpush1.msra.mxu0 0.0
    %1429 = vmatprep.subr.mxu0 0.0
    %1430 = vmatpush1.msra.mxu0 0.0
    %1431 = vmatprep.subr.mxu0 0.0
    %1432 = vmatpush1.msra.mxu0 0.0
    %1433 = vmatprep.subr.mxu0 0.0
    %1434 = vmatpush1.msra.mxu0 0.0
    %1435 = vmatprep.subr.mxu0 0.0
    %1436 = vmatpush1.msra.mxu0 0.0
    %1437 = vmatprep.subr.mxu0 0.0
    %1438 = vmatpush1.msra.mxu0 0.0
    %1439 = vmatprep.subr.mxu0 0.0
    %1440 = vmatpush1.msra.mxu0 0.0
    %1441 = vmatprep.mubr.f32.mxu0 0.0
    %1442 = vmatmul.mubr.f32.gmra.mrb[0].mxu0 %v1375
    %v1443 = vpop.f32.mrb[0].mxu0
    %v1444 = vadd.f32 %v107, %v1443
    %v1445 = vpop.f32.mrb[0].mxu0
    %1446 = vdwg.mxu0
    %v1447 = vadd.f32 %v287, %v1444
    %v1448 = vxor.u32 %v1447, 2147483648
    %v1449 = vmul.f32 %v1448, 1.442695
    %v1450 = vpow.pop %v1449
    %v1451 = vadd.f32 %v1450, 1.0
    %v1452 = vrcp.pop %v1451
    %v1453 = vmul.f32 1.0, %v1452
    %1455 = vrot.lane.b32.xlu0 %v1444, 64
    %v1456 = vpop.permute.xlu0 %1455
    %v1458 = vmul.f32 %v1453, %v1456
    %1460 = vrot.lane.b32.xlu0 %v1458, 64
    %v1461 = vpop.permute.xlu0 %1460
    %v1463 = vadd.f32 %v287, %v1461
    %v1464 = vtanh.pop %v1463
    %v1465 = vsub.f32 1.0, %v1453
    %1467 = vrot.lane.b32.xlu0 %v1464, 96
    %v1468 = vpop.permute.xlu0 %1467
    %v1470 = vmul.f32 %v1465, %v1468
    %v1471 = vmul.f32 %v1453, 0.0
    %v1472 = vadd.f32 %v1470, %v1471
    %1474 = vrot.lane.b32.xlu0 %v1472, 96
    %v1475 = vpop.permute.xlu0 %1474
    %v1476 = vsel %vm1373, %v1475, 0
    %1478 = vmatprep.subr.mxu0 0.0
    %1479 = vmatpush1.msra.mxu0 %v97
    %1480 = vmatprep.subr.mxu0 0.0
    %1481 = vmatpush1.msra.mxu0 %v98
    %1482 = vmatprep.subr.mxu0 0.0
    %1483 = vmatpush1.msra.mxu0 %v99
    %1484 = vmatprep.subr.mxu0 0.0
    %1485 = vmatpush1.msra.mxu0 %v100
    %1486 = vmatprep.subr.mxu0 0.0
    %1487 = vmatpush1.msra.mxu0 0.0
    %1488 = vmatprep.subr.mxu0 0.0
    %1489 = vmatpush1.msra.mxu0 0.0
    %1490 = vmatprep.subr.mxu0 0.0
    %1491 = vmatpush1.msra.mxu0 0.0
    %1492 = vmatprep.subr.mxu0 0.0
    %1493 = vmatpush1.msra.mxu0 0.0
    %1494 = vmatprep.subr.mxu0 0.0
    %1495 = vmatpush1.msra.mxu0 0.0
    %1496 = vmatprep.subr.mxu0 0.0
    %1497 = vmatpush1.msra.mxu0 0.0
    %1498 = vmatprep.subr.mxu0 0.0
    %1499 = vmatpush1.msra.mxu0 0.0
    %1500 = vmatprep.subr.mxu0 0.0
    %1501 = vmatpush1.msra.mxu0 0.0
    %1502 = vmatprep.subr.mxu0 0.0
    %1503 = vmatpush1.msra.mxu0 0.0
    %1504 = vmatprep.subr.mxu0 0.0
    %1505 = vmatpush1.msra.mxu0 0.0
    %1506 = vmatprep.subr.mxu0 0.0
    %1507 = vmatpush1.msra.mxu0 0.0
    %1508 = vmatprep.subr.mxu0 0.0
    %1509 = vmatpush1.msra.mxu0 0.0
    %1510 = vmatprep.subr.mxu0 0.0
    %1511 = vmatpush1.msra.mxu0 0.0
    %1512 = vmatprep.subr.mxu0 0.0
    %1513 = vmatpush1.msra.mxu0 0.0
    %1514 = vmatprep.subr.mxu0 0.0
    %1515 = vmatpush1.msra.mxu0 0.0
    %1516 = vmatprep.subr.mxu0 0.0
    %1517 = vmatpush1.msra.mxu0 0.0
    %1518 = vmatprep.subr.mxu0 0.0
    %1519 = vmatpush1.msra.mxu0 0.0
    %1520 = vmatprep.subr.mxu0 0.0
    %1521 = vmatpush1.msra.mxu0 0.0
    %1522 = vmatprep.subr.mxu0 0.0
    %1523 = vmatpush1.msra.mxu0 0.0
    %1524 = vmatprep.subr.mxu0 0.0
    %1525 = vmatpush1.msra.mxu0 0.0
    %1526 = vmatprep.subr.mxu0 0.0
    %1527 = vmatpush1.msra.mxu0 0.0
    %1528 = vmatprep.subr.mxu0 0.0
    %1529 = vmatpush1.msra.mxu0 0.0
    %1530 = vmatprep.subr.mxu0 0.0
    %1531 = vmatpush1.msra.mxu0 0.0
    %1532 = vmatprep.subr.mxu0 0.0
    %1533 = vmatpush1.msra.mxu0 0.0
    %1534 = vmatprep.subr.mxu0 0.0
    %1535 = vmatpush1.msra.mxu0 0.0
    %1536 = vmatprep.subr.mxu0 0.0
    %1537 = vmatpush1.msra.mxu0 0.0
    %1538 = vmatprep.subr.mxu0 0.0
    %1539 = vmatpush1.msra.mxu0 0.0
    %1540 = vmatprep.subr.mxu0 0.0
    %1541 = vmatpush1.msra.mxu0 0.0
    %1542 = vmatprep.mubr.f32.mxu0 0.0
    %1543 = vmatmul.mubr.f32.gmra.mrb[0].mxu0 %v1476
    %v1544 = vpop.f32.mrb[0].mxu0
    %v1545 = vadd.f32 %v107, %v1544
    %v1546 = vpop.f32.mrb[0].mxu0
    %1547 = vdwg.mxu0
    %v1548 = vadd.f32 %v442, %v1545
    %v1549 = vxor.u32 %v1548, 2147483648
    %v1550 = vmul.f32 %v1549, 1.442695
    %v1551 = vpow.pop %v1550
    %v1552 = vadd.f32 %v1551, 1.0
    %v1553 = vrcp.pop %v1552
    %v1554 = vmul.f32 1.0, %v1553
    %1556 = vrot.lane.b32.xlu0 %v1545, 64
    %v1557 = vpop.permute.xlu0 %1556
    %v1559 = vmul.f32 %v1554, %v1557
    %1561 = vrot.lane.b32.xlu0 %v1559, 64
    %v1562 = vpop.permute.xlu0 %1561
    %v1564 = vadd.f32 %v442, %v1562
    %v1565 = vtanh.pop %v1564
    %v1566 = vsub.f32 1.0, %v1554
    %1568 = vrot.lane.b32.xlu0 %v1565, 96
    %v1569 = vpop.permute.xlu0 %1568
    %v1571 = vmul.f32 %v1566, %v1569
    %v1572 = vmul.f32 %v1554, %v1472
    %v1573 = vadd.f32 %v1571, %v1572
    %1575 = vrot.lane.b32.xlu0 %v1573, 96
    %v1576 = vpop.permute.xlu0 %1575
    %v1577 = vsel %vm1373, %v1576, 0
    %1579 = vmatprep.subr.mxu0 0.0
    %1580 = vmatpush1.msra.mxu0 %v97
    %1581 = vmatprep.subr.mxu0 0.0
    %1582 = vmatpush1.msra.mxu0 %v98
    %1583 = vmatprep.subr.mxu0 0.0
    %1584 = vmatpush1.msra.mxu0 %v99
    %1585 = vmatprep.subr.mxu0 0.0
    %1586 = vmatpush1.msra.mxu0 %v100
    %1587 = vmatprep.subr.mxu0 0.0
    %1588 = vmatpush1.msra.mxu0 0.0
    %1589 = vmatprep.subr.mxu0 0.0
    %1590 = vmatpush1.msra.mxu0 0.0
    %1591 = vmatprep.subr.mxu0 0.0
    %1592 = vmatpush1.msra.mxu0 0.0
    %1593 = vmatprep.subr.mxu0 0.0
    %1594 = vmatpush1.msra.mxu0 0.0
    %1595 = vmatprep.subr.mxu0 0.0
    %1596 = vmatpush1.msra.mxu0 0.0
    %1597 = vmatprep.subr.mxu0 0.0
    %1598 = vmatpush1.msra.mxu0 0.0
    %1599 = vmatprep.subr.mxu0 0.0
    %1600 = vmatpush1.msra.mxu0 0.0
    %1601 = vmatprep.subr.mxu0 0.0
    %1602 = vmatpush1.msra.mxu0 0.0
    %1603 = vmatprep.subr.mxu0 0.0
    %1604 = vmatpush1.msra.mxu0 0.0
    %1605 = vmatprep.subr.mxu0 0.0
    %1606 = vmatpush1.msra.mxu0 0.0
    %1607 = vmatprep.subr.mxu0 0.0
    %1608 = vmatpush1.msra.mxu0 0.0
    %1609 = vmatprep.subr.mxu0 0.0
    %1610 = vmatpush1.msra.mxu0 0.0
    %1611 = vmatprep.subr.mxu0 0.0
    %1612 = vmatpush1.msra.mxu0 0.0
    %1613 = vmatprep.subr.mxu0 0.0
    %1614 = vmatpush1.msra.mxu0 0.0
    %1615 = vmatprep.subr.mxu0 0.0
    %1616 = vmatpush1.msra.mxu0 0.0
    %1617 = vmatprep.subr.mxu0 0.0
    %1618 = vmatpush1.msra.mxu0 0.0
    %1619 = vmatprep.subr.mxu0 0.0
    %1620 = vmatpush1.msra.mxu0 0.0
    %1621 = vmatprep.subr.mxu0 0.0
    %1622 = vmatpush1.msra.mxu0 0.0
    %1623 = vmatprep.subr.mxu0 0.0
    %1624 = vmatpush1.msra.mxu0 0.0
    %1625 = vmatprep.subr.mxu0 0.0
    %1626 = vmatpush1.msra.mxu0 0.0
    %1627 = vmatprep.subr.mxu0 0.0
    %1628 = vmatpush1.msra.mxu0 0.0
    %1629 = vmatprep.subr.mxu0 0.0
    %1630 = vmatpush1.msra.mxu0 0.0
    %1631 = vmatprep.subr.mxu0 0.0
    %1632 = vmatpush1.msra.mxu0 0.0
    %1633 = vmatprep.subr.mxu0 0.0
    %1634 = vmatpush1.msra.mxu0 0.0
    %1635 = vmatprep.subr.mxu0 0.0
    %1636 = vmatpush1.msra.mxu0 0.0
    %1637 = vmatprep.subr.mxu0 0.0
    %1638 = vmatpush1.msra.mxu0 0.0
    %1639 = vmatprep.subr.mxu0 0.0
    %1640 = vmatpush1.msra.mxu0 0.0
    %1641 = vmatprep.subr.mxu0 0.0
    %1642 = vmatpush1.msra.mxu0 0.0
    %1643 = vmatprep.mubr.f32.mxu0 0.0
    %1644 = vmatmul.mubr.f32.gmra.mrb[0].mxu0 %v1577
    %v1645 = vpop.f32.mrb[0].mxu0
    %v1646 = vadd.f32 %v107, %v1645
    %v1647 = vpop.f32.mrb[0].mxu0
    %1648 = vdwg.mxu0
    %v1649 = vadd.f32 %v597, %v1646
    %v1650 = vxor.u32 %v1649, 2147483648
    %v1651 = vmul.f32 %v1650, 1.442695
    %v1652 = vpow.pop %v1651
    %v1653 = vadd.f32 %v1652, 1.0
    %v1654 = vrcp.pop %v1653
    %v1655 = vmul.f32 1.0, %v1654
    %1657 = vrot.lane.b32.xlu0 %v1646, 64
    %v1658 = vpop.permute.xlu0 %1657
    %v1660 = vmul.f32 %v1655, %v1658
    %1662 = vrot.lane.b32.xlu0 %v1660, 64
    %v1663 = vpop.permute.xlu0 %1662
    %v1665 = vadd.f32 %v597, %v1663
    %v1666 = vtanh.pop %v1665
    %v1667 = vsub.f32 1.0, %v1655
    %1669 = vrot.lane.b32.xlu0 %v1666, 96
    %v1670 = vpop.permute.xlu0 %1669
    %v1672 = vmul.f32 %v1667, %v1670
    %v1673 = vmul.f32 %v1655, %v1573
    %v1674 = vadd.f32 %v1672, %v1673
    %1676 = vrot.lane.b32.xlu0 %v1674, 96
    %v1677 = vpop.permute.xlu0 %1676
    %v1678 = vsel %vm1373, %v1677, 0
    %1680 = vmatprep.subr.mxu0 0.0
    %1681 = vmatpush1.msra.mxu0 %v97
    %1682 = vmatprep.subr.mxu0 0.0
    %1683 = vmatpush1.msra.mxu0 %v98
    %1684 = vmatprep.subr.mxu0 0.0
    %1685 = vmatpush1.msra.mxu0 %v99
    %1686 = vmatprep.subr.mxu0 0.0
    %1687 = vmatpush1.msra.mxu0 %v100
    %1688 = vmatprep.subr.mxu0 0.0
    %1689 = vmatpush1.msra.mxu0 0.0
    %1690 = vmatprep.subr.mxu0 0.0
    %1691 = vmatpush1.msra.mxu0 0.0
    %1692 = vmatprep.subr.mxu0 0.0
    %1693 = vmatpush1.msra.mxu0 0.0
    %1694 = vmatprep.subr.mxu0 0.0
    %1695 = vmatpush1.msra.mxu0 0.0
    %1696 = vmatprep.subr.mxu0 0.0
    %1697 = vmatpush1.msra.mxu0 0.0
    %1698 = vmatprep.subr.mxu0 0.0
    %1699 = vmatpush1.msra.mxu0 0.0
    %1700 = vmatprep.subr.mxu0 0.0
    %1701 = vmatpush1.msra.mxu0 0.0
    %1702 = vmatprep.subr.mxu0 0.0
    %1703 = vmatpush1.msra.mxu0 0.0
    %1704 = vmatprep.subr.mxu0 0.0
    %1705 = vmatpush1.msra.mxu0 0.0
    %1706 = vmatprep.subr.mxu0 0.0
    %1707 = vmatpush1.msra.mxu0 0.0
    %1708 = vmatprep.subr.mxu0 0.0
    %1709 = vmatpush1.msra.mxu0 0.0
    %1710 = vmatprep.subr.mxu0 0.0
    %1711 = vmatpush1.msra.mxu0 0.0
    %1712 = vmatprep.subr.mxu0 0.0
    %1713 = vmatpush1.msra.mxu0 0.0
    %1714 = vmatprep.subr.mxu0 0.0
    %1715 = vmatpush1.msra.mxu0 0.0
    %1716 = vmatprep.subr.mxu0 0.0
    %1717 = vmatpush1.msra.mxu0 0.0
    %1718 = vmatprep.subr.mxu0 0.0
    %1719 = vmatpush1.msra.mxu0 0.0
    %1720 = vmatprep.subr.mxu0 0.0
    %1721 = vmatpush1.msra.mxu0 0.0
    %1722 = vmatprep.subr.mxu0 0.0
    %1723 = vmatpush1.msra.mxu0 0.0
    %1724 = vmatprep.subr.mxu0 0.0
    %1725 = vmatpush1.msra.mxu0 0.0
    %1726 = vmatprep.subr.mxu0 0.0
    %1727 = vmatpush1.msra.mxu0 0.0
    %1728 = vmatprep.subr.mxu0 0.0
    %1729 = vmatpush1.msra.mxu0 0.0
    %1730 = vmatprep.subr.mxu0 0.0
    %1731 = vmatpush1.msra.mxu0 0.0
    %1732 = vmatprep.subr.mxu0 0.0
    %1733 = vmatpush1.msra.mxu0 0.0
    %1734 = vmatprep.subr.mxu0 0.0
    %1735 = vmatpush1.msra.mxu0 0.0
    %1736 = vmatprep.subr.mxu0 0.0
    %1737 = vmatpush1.msra.mxu0 0.0
    %1738 = vmatprep.subr.mxu0 0.0
    %1739 = vmatpush1.msra.mxu0 0.0
    %1740 = vmatprep.subr.mxu0 0.0
    %1741 = vmatpush1.msra.mxu0 0.0
    %1742 = vmatprep.subr.mxu0 0.0
    %1743 = vmatpush1.msra.mxu0 0.0
    %1744 = vmatprep.mubr.f32.mxu0 0.0
    %1745 = vmatmul.mubr.f32.gmra.mrb[0].mxu0 %v1678
    %v1746 = vpop.f32.mrb[0].mxu0
    %v1747 = vadd.f32 %v107, %v1746
    %v1748 = vpop.f32.mrb[0].mxu0
    %1749 = vdwg.mxu0
    %v1750 = vadd.f32 %v752, %v1747
    %v1751 = vxor.u32 %v1750, 2147483648
    %v1752 = vmul.f32 %v1751, 1.442695
    %v1753 = vpow.pop %v1752
    %v1754 = vadd.f32 %v1753, 1.0
    %v1755 = vrcp.pop %v1754
    %v1756 = vmul.f32 1.0, %v1755
    %1758 = vrot.lane.b32.xlu0 %v1747, 64
    %v1759 = vpop.permute.xlu0 %1758
    %v1761 = vmul.f32 %v1756, %v1759
    %1763 = vrot.lane.b32.xlu0 %v1761, 64
    %v1764 = vpop.permute.xlu0 %1763
    %v1766 = vadd.f32 %v752, %v1764
    %v1767 = vtanh.pop %v1766
    %v1768 = vsub.f32 1.0, %v1756
    %1770 = vrot.lane.b32.xlu0 %v1767, 96
    %v1771 = vpop.permute.xlu0 %1770
    %v1773 = vmul.f32 %v1768, %v1771
    %v1774 = vmul.f32 %v1756, %v1674
    %v1775 = vadd.f32 %v1773, %v1774
    %1777 = vrot.lane.b32.xlu0 %v1775, 96
    %v1778 = vpop.permute.xlu0 %1777
    %v1779 = vsel %vm1373, %v1778, 0
    %1781 = vmatprep.subr.mxu0 0.0
    %1782 = vmatpush1.msra.mxu0 %v97
    %1783 = vmatprep.subr.mxu0 0.0
    %1784 = vmatpush1.msra.mxu0 %v98
    %1785 = vmatprep.subr.mxu0 0.0
    %1786 = vmatpush1.msra.mxu0 %v99
    %1787 = vmatprep.subr.mxu0 0.0
    %1788 = vmatpush1.msra.mxu0 %v100
    %1789 = vmatprep.subr.mxu0 0.0
    %1790 = vmatpush1.msra.mxu0 0.0
    %1791 = vmatprep.subr.mxu0 0.0
    %1792 = vmatpush1.msra.mxu0 0.0
    %1793 = vmatprep.subr.mxu0 0.0
    %1794 = vmatpush1.msra.mxu0 0.0
    %1795 = vmatprep.subr.mxu0 0.0
    %1796 = vmatpush1.msra.mxu0 0.0
    %1797 = vmatprep.subr.mxu0 0.0
    %1798 = vmatpush1.msra.mxu0 0.0
    %1799 = vmatprep.subr.mxu0 0.0
    %1800 = vmatpush1.msra.mxu0 0.0
    %1801 = vmatprep.subr.mxu0 0.0
    %1802 = vmatpush1.msra.mxu0 0.0
    %1803 = vmatprep.subr.mxu0 0.0
    %1804 = vmatpush1.msra.mxu0 0.0
    %1805 = vmatprep.subr.mxu0 0.0
    %1806 = vmatpush1.msra.mxu0 0.0
    %1807 = vmatprep.subr.mxu0 0.0
    %1808 = vmatpush1.msra.mxu0 0.0
    %1809 = vmatprep.subr.mxu0 0.0
    %1810 = vmatpush1.msra.mxu0 0.0
    %1811 = vmatprep.subr.mxu0 0.0
    %1812 = vmatpush1.msra.mxu0 0.0
    %1813 = vmatprep.subr.mxu0 0.0
    %1814 = vmatpush1.msra.mxu0 0.0
    %1815 = vmatprep.subr.mxu0 0.0
    %1816 = vmatpush1.msra.mxu0 0.0
    %1817 = vmatprep.subr.mxu0 0.0
    %1818 = vmatpush1.msra.mxu0 0.0
    %1819 = vmatprep.subr.mxu0 0.0
    %1820 = vmatpush1.msra.mxu0 0.0
    %1821 = vmatprep.subr.mxu0 0.0
    %1822 = vmatpush1.msra.mxu0 0.0
    %1823 = vmatprep.subr.mxu0 0.0
    %1824 = vmatpush1.msra.mxu0 0.0
    %1825 = vmatprep.subr.mxu0 0.0
    %1826 = vmatpush1.msra.mxu0 0.0
    %1827 = vmatprep.subr.mxu0 0.0
    %1828 = vmatpush1.msra.mxu0 0.0
    %1829 = vmatprep.subr.mxu0 0.0
    %1830 = vmatpush1.msra.mxu0 0.0
    %1831 = vmatprep.subr.mxu0 0.0
    %1832 = vmatpush1.msra.mxu0 0.0
    %1833 = vmatprep.subr.mxu0 0.0
    %1834 = vmatpush1.msra.mxu0 0.0
    %1835 = vmatprep.subr.mxu0 0.0
    %1836 = vmatpush1.msra.mxu0 0.0
    %1837 = vmatprep.subr.mxu0 0.0
    %1838 = vmatpush1.msra.mxu0 0.0
    %1839 = vmatprep.subr.mxu0 0.0
    %1840 = vmatpush1.msra.mxu0 0.0
    %1841 = vmatprep.subr.mxu0 0.0
    %1842 = vmatpush1.msra.mxu0 0.0
    %1843 = vmatprep.subr.mxu0 0.0
    %1844 = vmatpush1.msra.mxu0 0.0
    %1845 = vmatprep.mubr.f32.mxu0 0.0
    %1846 = vmatmul.mubr.f32.gmra.mrb[0].mxu0 %v1779
    %v1847 = vpop.f32.mrb[0].mxu0
    %v1848 = vadd.f32 %v107, %v1847
    %v1849 = vpop.f32.mrb[0].mxu0
    %1850 = vdwg.mxu0
    %v1851 = vadd.f32 %v907, %v1848
    %v1852 = vxor.u32 %v1851, 2147483648
    %v1853 = vmul.f32 %v1852, 1.442695
    %v1854 = vpow.pop %v1853
    %v1855 = vadd.f32 %v1854, 1.0
    %v1856 = vrcp.pop %v1855
    %v1857 = vmul.f32 1.0, %v1856
    %1859 = vrot.lane.b32.xlu0 %v1848, 64
    %v1860 = vpop.permute.xlu0 %1859
    %v1862 = vmul.f32 %v1857, %v1860
    %1864 = vrot.lane.b32.xlu0 %v1862, 64
    %v1865 = vpop.permute.xlu0 %1864
    %v1867 = vadd.f32 %v907, %v1865
    %v1868 = vtanh.pop %v1867
    %v1869 = vsub.f32 1.0, %v1857
    %1871 = vrot.lane.b32.xlu0 %v1868, 96
    %v1872 = vpop.permute.xlu0 %1871
    %v1874 = vmul.f32 %v1869, %v1872
    %v1875 = vmul.f32 %v1857, %v1775
    %v1876 = vadd.f32 %v1874, %v1875
    %1878 = vrot.lane.b32.xlu0 %v1876, 96
    %v1879 = vpop.permute.xlu0 %1878
    %v1880 = vsel %vm1373, %v1879, 0
    %1882 = vmatprep.subr.mxu0 0.0
    %1883 = vmatpush1.msra.mxu0 %v97
    %1884 = vmatprep.subr.mxu0 0.0
    %1885 = vmatpush1.msra.mxu0 %v98
    %1886 = vmatprep.subr.mxu0 0.0
    %1887 = vmatpush1.msra.mxu0 %v99
    %1888 = vmatprep.subr.mxu0 0.0
    %1889 = vmatpush1.msra.mxu0 %v100
    %1890 = vmatprep.subr.mxu0 0.0
    %1891 = vmatpush1.msra.mxu0 0.0
    %1892 = vmatprep.subr.mxu0 0.0
    %1893 = vmatpush1.msra.mxu0 0.0
    %1894 = vmatprep.subr.mxu0 0.0
    %1895 = vmatpush1.msra.mxu0 0.0
    %1896 = vmatprep.subr.mxu0 0.0
    %1897 = vmatpush1.msra.mxu0 0.0
    %1898 = vmatprep.subr.mxu0 0.0
    %1899 = vmatpush1.msra.mxu0 0.0
    %1900 = vmatprep.subr.mxu0 0.0
    %1901 = vmatpush1.msra.mxu0 0.0
    %1902 = vmatprep.subr.mxu0 0.0
    %1903 = vmatpush1.msra.mxu0 0.0
    %1904 = vmatprep.subr.mxu0 0.0
    %1905 = vmatpush1.msra.mxu0 0.0
    %1906 = vmatprep.subr.mxu0 0.0
    %1907 = vmatpush1.msra.mxu0 0.0
    %1908 = vmatprep.subr.mxu0 0.0
    %1909 = vmatpush1.msra.mxu0 0.0
    %1910 = vmatprep.subr.mxu0 0.0
    %1911 = vmatpush1.msra.mxu0 0.0
    %1912 = vmatprep.subr.mxu0 0.0
    %1913 = vmatpush1.msra.mxu0 0.0
    %1914 = vmatprep.subr.mxu0 0.0
    %1915 = vmatpush1.msra.mxu0 0.0
    %1916 = vmatprep.subr.mxu0 0.0
    %1917 = vmatpush1.msra.mxu0 0.0
    %1918 = vmatprep.subr.mxu0 0.0
    %1919 = vmatpush1.msra.mxu0 0.0
    %1920 = vmatprep.subr.mxu0 0.0
    %1921 = vmatpush1.msra.mxu0 0.0
    %1922 = vmatprep.subr.mxu0 0.0
    %1923 = vmatpush1.msra.mxu0 0.0
    %1924 = vmatprep.subr.mxu0 0.0
    %1925 = vmatpush1.msra.mxu0 0.0
    %1926 = vmatprep.subr.mxu0 0.0
    %1927 = vmatpush1.msra.mxu0 0.0
    %1928 = vmatprep.subr.mxu0 0.0
    %1929 = vmatpush1.msra.mxu0 0.0
    %1930 = vmatprep.subr.mxu0 0.0
    %1931 = vmatpush1.msra.mxu0 0.0
    %1932 = vmatprep.subr.mxu0 0.0
    %1933 = vmatpush1.msra.mxu0 0.0
    %1934 = vmatprep.subr.mxu0 0.0
    %1935 = vmatpush1.msra.mxu0 0.0
    %1936 = vmatprep.subr.mxu0 0.0
    %1937 = vmatpush1.msra.mxu0 0.0
    %1938 = vmatprep.subr.mxu0 0.0
    %1939 = vmatpush1.msra.mxu0 0.0
    %1940 = vmatprep.subr.mxu0 0.0
    %1941 = vmatpush1.msra.mxu0 0.0
    %1942 = vmatprep.subr.mxu0 0.0
    %1943 = vmatpush1.msra.mxu0 0.0
    %1944 = vmatprep.subr.mxu0 0.0
    %1945 = vmatpush1.msra.mxu0 0.0
    %1946 = vmatprep.mubr.f32.mxu0 0.0
    %1947 = vmatmul.mubr.f32.gmra.mrb[0].mxu0 %v1880
    %v1948 = vpop.f32.mrb[0].mxu0
    %v1949 = vadd.f32 %v107, %v1948
    %v1950 = vpop.f32.mrb[0].mxu0
    %1951 = vdwg.mxu0
    %v1952 = vadd.f32 %v1062, %v1949
    %v1953 = vxor.u32 %v1952, 2147483648
    %v1954 = vmul.f32 %v1953, 1.442695
    %v1955 = vpow.pop %v1954
    %v1956 = vadd.f32 %v1955, 1.0
    %v1957 = vrcp.pop %v1956
    %v1958 = vmul.f32 1.0, %v1957
    %1960 = vrot.lane.b32.xlu0 %v1949, 64
    %v1961 = vpop.permute.xlu0 %1960
    %v1963 = vmul.f32 %v1958, %v1961
    %1965 = vrot.lane.b32.xlu0 %v1963, 64
    %v1966 = vpop.permute.xlu0 %1965
    %v1968 = vadd.f32 %v1062, %v1966
    %v1969 = vtanh.pop %v1968
    %v1970 = vsub.f32 1.0, %v1958
    %1972 = vrot.lane.b32.xlu0 %v1969, 96
    %v1973 = vpop.permute.xlu0 %1972
    %v1975 = vmul.f32 %v1970, %v1973
    %v1976 = vmul.f32 %v1958, %v1876
    %v1977 = vadd.f32 %v1975, %v1976
    %1979 = vrot.lane.b32.xlu0 %v1977, 96
    %v1980 = vpop.permute.xlu0 %1979
    %v1981 = vsel %vm1373, %v1980, 0
    %1983 = vmatprep.subr.mxu0 0.0
    %1984 = vmatpush1.msra.mxu0 %v97
    %1985 = vmatprep.subr.mxu0 0.0
    %1986 = vmatpush1.msra.mxu0 %v98
    %1987 = vmatprep.subr.mxu0 0.0
    %1988 = vmatpush1.msra.mxu0 %v99
    %1989 = vmatprep.subr.mxu0 0.0
    %1990 = vmatpush1.msra.mxu0 %v100
    %1991 = vmatprep.subr.mxu0 0.0
    %1992 = vmatpush1.msra.mxu0 0.0
    %1993 = vmatprep.subr.mxu0 0.0
    %1994 = vmatpush1.msra.mxu0 0.0
    %1995 = vmatprep.subr.mxu0 0.0
    %1996 = vmatpush1.msra.mxu0 0.0
    %1997 = vmatprep.subr.mxu0 0.0
    %1998 = vmatpush1.msra.mxu0 0.0
    %1999 = vmatprep.subr.mxu0 0.0
    %2000 = vmatpush1.msra.mxu0 0.0
    %2001 = vmatprep.subr.mxu0 0.0
    %2002 = vmatpush1.msra.mxu0 0.0
    %2003 = vmatprep.subr.mxu0 0.0
    %2004 = vmatpush1.msra.mxu0 0.0
    %2005 = vmatprep.subr.mxu0 0.0
    %2006 = vmatpush1.msra.mxu0 0.0
    %2007 = vmatprep.subr.mxu0 0.0
    %2008 = vmatpush1.msra.mxu0 0.0
    %2009 = vmatprep.subr.mxu0 0.0
    %2010 = vmatpush1.msra.mxu0 0.0
    %2011 = vmatprep.subr.mxu0 0.0
    %2012 = vmatpush1.msra.mxu0 0.0
    %2013 = vmatprep.subr.mxu0 0.0
    %2014 = vmatpush1.msra.mxu0 0.0
    %2015 = vmatprep.subr.mxu0 0.0
    %2016 = vmatpush1.msra.mxu0 0.0
    %2017 = vmatprep.subr.mxu0 0.0
    %2018 = vmatpush1.msra.mxu0 0.0
    %2019 = vmatprep.subr.mxu0 0.0
    %2020 = vmatpush1.msra.mxu0 0.0
    %2021 = vmatprep.subr.mxu0 0.0
    %2022 = vmatpush1.msra.mxu0 0.0
    %2023 = vmatprep.subr.mxu0 0.0
    %2024 = vmatpush1.msra.mxu0 0.0
    %2025 = vmatprep.subr.mxu0 0.0
    %2026 = vmatpush1.msra.mxu0 0.0
    %2027 = vmatprep.subr.mxu0 0.0
    %2028 = vmatpush1.msra.mxu0 0.0
    %2029 = vmatprep.subr.mxu0 0.0
    %2030 = vmatpush1.msra.mxu0 0.0
    %2031 = vmatprep.subr.mxu0 0.0
    %2032 = vmatpush1.msra.mxu0 0.0
    %2033 = vmatprep.subr.mxu0 0.0
    %2034 = vmatpush1.msra.mxu0 0.0
    %2035 = vmatprep.subr.mxu0 0.0
    %2036 = vmatpush1.msra.mxu0 0.0
    %2037 = vmatprep.subr.mxu0 0.0
    %2038 = vmatpush1.msra.mxu0 0.0
    %2039 = vmatprep.subr.mxu0 0.0
    %2040 = vmatpush1.msra.mxu0 0.0
    %2041 = vmatprep.subr.mxu0 0.0
    %2042 = vmatpush1.msra.mxu0 0.0
    %2043 = vmatprep.subr.mxu0 0.0
    %2044 = vmatpush1.msra.mxu0 0.0
    %2045 = vmatprep.subr.mxu0 0.0
    %2046 = vmatpush1.msra.mxu0 0.0
    %2047 = vmatprep.mubr.f32.mxu0 0.0
    %2048 = vmatmul.mubr.f32.gmra.mrb[0].mxu0 %v1981
    %v2049 = vpop.f32.mrb[0].mxu0
    %v2050 = vadd.f32 %v107, %v2049
    %v2051 = vpop.f32.mrb[0].mxu0
    %2052 = vdwg.mxu0
    %v2053 = vadd.f32 %v1217, %v2050
    %v2054 = vxor.u32 %v2053, 2147483648
    %v2055 = vmul.f32 %v2054, 1.442695
    %v2056 = vpow.pop %v2055
    %v2057 = vadd.f32 %v2056, 1.0
    %v2058 = vrcp.pop %v2057
    %v2059 = vmul.f32 1.0, %v2058
    %2061 = vrot.lane.b32.xlu0 %v2050, 64
    %v2062 = vpop.permute.xlu0 %2061
    %v2064 = vmul.f32 %v2059, %v2062
    %2066 = vrot.lane.b32.xlu0 %v2064, 64
    %v2067 = vpop.permute.xlu0 %2066
    %v2069 = vadd.f32 %v1217, %v2067
    %v2070 = vtanh.pop %v2069
    %v2071 = vsub.f32 1.0, %v2059
    %2073 = vrot.lane.b32.xlu0 %v2070, 96
    %v2074 = vpop.permute.xlu0 %2073
    %v2076 = vmul.f32 %v2071, %v2074
    %v2077 = vmul.f32 %v2059, %v1977
    %v2078 = vadd.f32 %v2076, %v2077
    %2080 = vrot.lane.b32.xlu0 %v2078, 96
    %v2081 = vpop.permute.xlu0 %2080
    %v2082 = vsel %vm1373, %v2081, 0
    %2084 = vmatprep.subr.mxu0 0.0
    %2085 = vmatpush1.msra.mxu0 %v97
    %2086 = vmatprep.subr.mxu0 0.0
    %2087 = vmatpush1.msra.mxu0 %v98
    %2088 = vmatprep.subr.mxu0 0.0
    %2089 = vmatpush1.msra.mxu0 %v99
    %2090 = vmatprep.subr.mxu0 0.0
    %2091 = vmatpush1.msra.mxu0 %v100
    %2092 = vmatprep.subr.mxu0 0.0
    %2093 = vmatpush1.msra.mxu0 0.0
    %2094 = vmatprep.subr.mxu0 0.0
    %2095 = vmatpush1.msra.mxu0 0.0
    %2096 = vmatprep.subr.mxu0 0.0
    %2097 = vmatpush1.msra.mxu0 0.0
    %2098 = vmatprep.subr.mxu0 0.0
    %2099 = vmatpush1.msra.mxu0 0.0
    %2100 = vmatprep.subr.mxu0 0.0
    %2101 = vmatpush1.msra.mxu0 0.0
    %2102 = vmatprep.subr.mxu0 0.0
    %2103 = vmatpush1.msra.mxu0 0.0
    %2104 = vmatprep.subr.mxu0 0.0
    %2105 = vmatpush1.msra.mxu0 0.0
    %2106 = vmatprep.subr.mxu0 0.0
    %2107 = vmatpush1.msra.mxu0 0.0
    %2108 = vmatprep.subr.mxu0 0.0
    %2109 = vmatpush1.msra.mxu0 0.0
    %2110 = vmatprep.subr.mxu0 0.0
    %2111 = vmatpush1.msra.mxu0 0.0
    %2112 = vmatprep.subr.mxu0 0.0
    %2113 = vmatpush1.msra.mxu0 0.0
    %2114 = vmatprep.subr.mxu0 0.0
    %2115 = vmatpush1.msra.mxu0 0.0
    %2116 = vmatprep.subr.mxu0 0.0
    %2117 = vmatpush1.msra.mxu0 0.0
    %2118 = vmatprep.subr.mxu0 0.0
    %2119 = vmatpush1.msra.mxu0 0.0
    %2120 = vmatprep.subr.mxu0 0.0
    %2121 = vmatpush1.msra.mxu0 0.0
    %2122 = vmatprep.subr.mxu0 0.0
    %2123 = vmatpush1.msra.mxu0 0.0
    %2124 = vmatprep.subr.mxu0 0.0
    %2125 = vmatpush1.msra.mxu0 0.0
    %2126 = vmatprep.subr.mxu0 0.0
    %2127 = vmatpush1.msra.mxu0 0.0
    %2128 = vmatprep.subr.mxu0 0.0
    %2129 = vmatpush1.msra.mxu0 0.0
    %2130 = vmatprep.subr.mxu0 0.0
    %2131 = vmatpush1.msra.mxu0 0.0
    %2132 = vmatprep.subr.mxu0 0.0
    %2133 = vmatpush1.msra.mxu0 0.0
    %2134 = vmatprep.subr.mxu0 0.0
    %2135 = vmatpush1.msra.mxu0 0.0
    %2136 = vmatprep.subr.mxu0 0.0
    %2137 = vmatpush1.msra.mxu0 0.0
    %2138 = vmatprep.subr.mxu0 0.0
    %2139 = vmatpush1.msra.mxu0 0.0
    %2140 = vmatprep.subr.mxu0 0.0
    %2141 = vmatpush1.msra.mxu0 0.0
    %2142 = vmatprep.subr.mxu0 0.0
    %2143 = vmatpush1.msra.mxu0 0.0
    %2144 = vmatprep.subr.mxu0 0.0
    %2145 = vmatpush1.msra.mxu0 0.0
    %2146 = vmatprep.subr.mxu0 0.0
    %2147 = vmatpush1.msra.mxu0 0.0
    %2148 = vmatprep.mubr.f32.mxu0 0.0
    %2149 = vmatmul.mubr.f32.gmra.mrb[0].mxu0 %v2082
    %v2150 = vpop.f32.mrb[0].mxu0
    %v2151 = vadd.f32 %v107, %v2150
    %v2152 = vpop.f32.mrb[0].mxu0
    %2153 = vdwg.mxu0
    %v2154 = vadd.f32 %v1372, %v2151
    %v2155 = vxor.u32 %v2154, 2147483648
    %v2156 = vmul.f32 %v2155, 1.442695
    %v2157 = vpow.pop %v2156
    %v2158 = vadd.f32 %v2157, 1.0
    %v2159 = vrcp.pop %v2158
    %v2160 = vmul.f32 1.0, %v2159
    %2162 = vrot.lane.b32.xlu0 %v2151, 64
    %v2163 = vpop.permute.xlu0 %2162
    %v2165 = vmul.f32 %v2160, %v2163
    %2167 = vrot.lane.b32.xlu0 %v2165, 64
    %v2168 = vpop.permute.xlu0 %2167
    %v2170 = vadd.f32 %v1372, %v2168
    %v2171 = vtanh.pop %v2170
    %v2172 = vsub.f32 1.0, %v2160
    %2174 = vrot.lane.b32.xlu0 %v2171, 96
    %v2175 = vpop.permute.xlu0 %2174
    %v2177 = vmul.f32 %v2172, %v2175
    %v2178 = vmul.f32 %v2160, %v2078
    %v2179 = vadd.f32 %v2177, %v2178
    %2181 = vrot.lane.b32.xlu0 %v2179, 96
    %v2182 = vpop.permute.xlu0 %2181
    %vm2184 = vcmask 254976
    %2185 = vst.msk [vmem:[#allocation11] sm:$0x3] %vm2184, %v2182
    // Predicated region
    $region58: #{gru_context_pallas.1} parent=1 // pred_check
      _
    $region59: #{gru_context_pallas.1} parent=1 // pred_check_branch
      %2187 = sbr.rel (0) target = $region61
    $region60: #{gru_context_pallas.1} parent=1 // pred_region
      %s2189 = ssub.s32 32, 32
      %2190 = vsyncadd [#allocation4], %s2189
      %s2192 = sshll.u32 [#allocation11], 4
      %s2193 = int_to_ptr.vmem [resolvable:$true] %s2192
      %2195 = dma.vmem_to_hbm [thread:$0]  %s2193, 32, %s9, [#allocation4]
    $region61: #{gru_context_pallas.1} parent=1 // pred_fallthru
      _
    // Predicated region
    $region62: #{gru_context_pallas.1} parent=1 // pred_check
      _
    $region63: #{gru_context_pallas.1} parent=1 // pred_check_branch
      %2197 = sbr.rel (0) target = $region65
    $region64: #{gru_context_pallas.1} parent=1 // pred_region
      %2198 = dma.done [#allocation4], 32
    $region65: #{gru_context_pallas.1} parent=1 // pred_fallthru
      _
    %2199 = vsyncpa [#allocation3], 1
    %2200 = vsyncpa [#allocation6], 1
    %2201 = vsyncpa [#allocation9], 1
    %2202 = vsyncpa [#allocation4], 1

</llo_original>
